<compile_context>
chip_gen: v6e
topology: v6e:2x2x1
jax: 0.10.0
libtpu: 0.0.40
codegen_flags: <defaults>
</compile_context>

<pallas_src>
import math
import jax
import jax.numpy as jnp
from jax.experimental import pallas as pl
from jax.experimental.pallas import tpu as pltpu

B = 2             # graph batch (grid axis; "parallel" -> megacore / 2nd TC on v7x)
N_NODES = 8       # N : number of graph nodes
T = 4             # features.size()[1] : number of graph "slices"
F_IN = 32         # in_features
F_OUT = 32        # out_features
N_EDGE = 3        # weight.size(0) : number of edge types
N_LAYERS = 2      # GraphAttention n_layers
ALPHA = 0.2       # LeakyReLU negative slope
NEG_INF = -9e15   # mask value used by the PyTorch module

# highway != '' requires in_features == out_features (fail loudly on config change)
assert F_IN == F_OUT, "GraphConvolutionLayer highway path requires in_features == out_features"

SLAB = T * F_IN                 # 128 : lane-dense feature-slab width
NCOL = N_EDGE * T * N_NODES     # 96  : attention-logit lanes, col = j*32 + t*8 + i
HW0 = N_EDGE * F_OUT            # 96  : highway columns start inside xw
QPAD = 8                        # q1 columns padded 3 -> 8


def _gat_kernel(x_ref, mask_ref, wcat_ref, bcat_ref, m2_ref, c2_ref, wq1_ref, c1_ref, out_ref):
    """Whole GraphAttention forward (N_LAYERS layers) for one graph of the batch."""
    x_slab = x_ref[...]           # [8, 128] node-on-sublanes feature slab
    mask_bias = mask_ref[...]     # [8, 96]  additive adjacency mask (0 / -9e15)

    # Slice-major rows (row = t*N + n), built once with static lane slices; both
    # layouts (x_t and x_slab) are kept live across layers.
    x_t = jnp.concatenate([x_slab[:, t * F_IN:(t + 1) * F_IN] for t in range(T)], axis=0)  # [32, 32]

    for layer in range(N_LAYERS):
        xt16 = x_t.astype(jnp.bfloat16)
        xs16 = x_slab.astype(jnp.bfloat16)

        # (1) supports for the 3 edge types + highway pre-activation in ONE lane-dense
        #     matmul: xw[t*8+k, j*32+g] = support_{j,t}[k,g]; xw[:, 96:128] = x@W_hw+b_hw.
        xw = jnp.dot(xt16, wcat_ref[layer],
                     preferred_element_type=jnp.float32) + bcat_ref[layer]          # [32, 128]

        # (2) wh2 logits straight from the slab via a block-diagonal folded weight:
        #     e2[k, j*32+t*8+i] = support_{j,t}[k,:] @ a2_j  (broadcast over i).
        e2 = jnp.dot(xs16, m2_ref[layer],
                     preferred_element_type=jnp.float32) + c2_ref[layer]             # [8, 96]

        # (3) wh1 logits: one tiny matmul + ONE small transpose (replaces 12 .T's).
        q1 = jnp.dot(xt16, wq1_ref[layer],
                     preferred_element_type=jnp.float32) + c1_ref[layer]             # [32, 8]
        q1t = q1.T                                                                   # [8, 32]
        e1row = jnp.concatenate([q1t[j:j + 1, :] for j in range(N_EDGE)], axis=1)    # [1, 96]

        # (4) LeakyReLU + additive mask + softmax over neighbours on ONE lane-dense
        #     [8, 96] tile (neighbour axis on sublanes -> 3 roll+op reduce, 1 exp).
        e = e1row + e2
        e = jnp.where(e > 0, e, ALPHA * e)                      # LeakyReLU(0.2)
        masked = e + mask_bias
        m = jnp.max(masked, axis=0, keepdims=True)              # [1, 96]
        p = jnp.exp(masked - m)
        attn = p * pl.reciprocal(jnp.sum(p, axis=0, keepdims=True), approx=True)     # [8, 96]
        # attn_dropout / edge_dropout are identity in eval mode.

        # (5) fused attn @ support: one bf16 [8,24]x[24,32] matmul per slice,
        #     contracting the combined (edge, neighbour) axis (sums over edge types).
        attn_t = attn.T                                          # [96, 8]: rows (j,t,i), lanes k
        h_blocks = []
        for t in range(T):
            l_t = jnp.concatenate(
                [attn_t[j * T * N_NODES + t * N_NODES: j * T * N_NODES + (t + 1) * N_NODES, :]
                 for j in range(N_EDGE)], axis=1)                # [8, 24]  (i ; j,k)
            r_t = jnp.concatenate(
                [xw[t * N_NODES:(t + 1) * N_NODES, j * F_OUT:(j + 1) * F_OUT]
                 for j in range(N_EDGE)], axis=0)                # [24, 32] (j,k ; g)
            h_blocks.append(jnp.dot(l_t.astype(jnp.bfloat16), r_t.astype(jnp.bfloat16),
                                    preferred_element_type=jnp.float32))             # [8, 32]
        hsum = jnp.concatenate(h_blocks, axis=0)                 # [32, 32]

        # (6) activation == 'relu', highway == 'sigmoid'
        act = jnp.maximum(hsum, 0.0)
        transform = jax.nn.sigmoid(xw[:, HW0:])                  # [32, 32]
        x_t = act * transform + x_t * (1.0 - transform)
        x_slab = jnp.concatenate([x_t[t * N_NODES:(t + 1) * N_NODES, :] for t in range(T)], axis=1)
        # Inter-layer GraphAttention dropout is identity in eval mode.

    out_ref[...] = x_slab.astype(out_ref.dtype)                  # lane-dense [8, 128] store


def _fuse_layer_params(p):
    """Fold one layer's parameters into the kernel's fused weight blocks."""
    w, b, a1, a2, whw, bhw = p
    # wh = (x@W_j + b_j) @ a_j  ==  x @ (W_j @ a_j) + b_j . a_j
    qvec1 = jnp.einsum('jfg,jg->jf', w, a1)                      # [3, F_IN]
    qvec2 = jnp.einsum('jfg,jg->jf', w, a2)
    c1 = jnp.einsum('jg,jg->j', b[:, 0, :], a1)                  # [3]
    c2 = jnp.einsum('jg,jg->j', b[:, 0, :], a2)

    wcat = jnp.concatenate([w[0], w[1], w[2], whw], axis=1)      # [F_IN, 128] (lane-dense xw)
    bcat = jnp.concatenate([b[0, 0], b[1, 0], b[2, 0], bhw[0]])  # [128]

    # Block-diagonal folded wh2 weight: m2[t*F_IN+f, j*32+t*8+i] = qvec2[j, f]
    m2 = jnp.einsum('jf,tu->tfju', qvec2, jnp.eye(T, dtype=qvec2.dtype))   # [T, F, 3, T]
    m2 = jnp.broadcast_to(m2[..., None], (T, F_IN, N_EDGE, T, N_NODES))
    m2 = m2.reshape(T * F_IN, NCOL)                                         # [128, 96]
    c2row = jnp.broadcast_to(c2[:, None, None], (N_EDGE, T, N_NODES)).reshape(NCOL)

    wq1 = jnp.concatenate([qvec1.T, jnp.zeros((F_IN, QPAD - N_EDGE), qvec1.dtype)], axis=1)  # [F_IN, 8]
    c1row = jnp.concatenate([c1, jnp.zeros((QPAD - N_EDGE,), c1.dtype)])                     # [8]
    return wcat, bcat, m2, c2row, wq1, c1row


@jax.jit
def gat_forward(inputs, adj, layer_params):
    """inputs: [B, N, T, F_in], adj: [B, 3, T, N, N]  ->  [B, N, T, F_out]."""
    bsz = inputs.shape[0]
    x_slab = inputs.reshape(bsz, N_NODES, SLAB)                   # free reshape, lane-dense
    # Additive adjacency mask in the kernel's [neighbour ; (edge, slice, node)] layout.
    mask = jnp.where(adj > 0, 0.0, NEG_INF).astype(jnp.float32)
    mask = jnp.transpose(mask, (0, 4, 1, 2, 3)).reshape(bsz, N_NODES, NCOL)   # [B, 8, 96]

    fused = [_fuse_layer_params(p) for p in layer_params]
    wcat = jnp.stack([f[0] for f in fused]).astype(jnp.bfloat16)  # [L, 32, 128]
    bcat = jnp.stack([f[1] for f in fused])[:, None, :]           # [L, 1, 128] f32
    m2 = jnp.stack([f[2] for f in fused]).astype(jnp.bfloat16)    # [L, 128, 96]
    c2 = jnp.stack([f[3] for f in fused])[:, None, :]             # [L, 1, 96]  f32
    wq1 = jnp.stack([f[4] for f in fused]).astype(jnp.bfloat16)   # [L, 32, 8]
    c1 = jnp.stack([f[5] for f in fused])[:, None, :]             # [L, 1, 8]   f32

    per_graph = lambda g: (g, 0, 0)
    shared = lambda g: (0, 0, 0)

    out = pl.pallas_call(
        _gat_kernel,
        out_shape=jax.ShapeDtypeStruct((bsz, N_NODES, T * F_OUT), jnp.float32),
        grid=(bsz,),
        in_specs=[
            pl.BlockSpec((None, N_NODES, SLAB), per_graph),              # features slab
            pl.BlockSpec((None, N_NODES, NCOL), per_graph),              # additive mask
            pl.BlockSpec((N_LAYERS, F_IN, 4 * F_OUT), shared),           # wcat
            pl.BlockSpec((N_LAYERS, 1, 4 * F_OUT), shared),              # bcat
            pl.BlockSpec((N_LAYERS, T * F_IN, NCOL), shared),            # m2
            pl.BlockSpec((N_LAYERS, 1, NCOL), shared),                   # c2
            pl.BlockSpec((N_LAYERS, F_IN, QPAD), shared),                # wq1
            pl.BlockSpec((N_LAYERS, 1, QPAD), shared),                   # c1
        ],
        out_specs=pl.BlockSpec((None, N_NODES, T * F_OUT), per_graph),
        compiler_params=pltpu.CompilerParams(dimension_semantics=("parallel",)),
    )(x_slab, mask, wcat, bcat, m2, c2, wq1, c1)

    return out.reshape(bsz, N_NODES, T, F_OUT)                    # free reshape


# ----------------------------- pure-JAX reference -----------------------------

def _gcn_layer_reference(x, adj, p):
    """Line-by-line port of GraphConvolutionLayer.forward (eval mode), single graph."""
    w, b, a1, a2, whw, bhw = p
    outs = []
    for i in range(T):
        xi = x[:, i, :]
        acc = jnp.zeros((N_NODES, F_OUT), jnp.float32)
        for j in range(N_EDGE):
            support = xi @ w[j] + b[j]
            wh1 = support @ a1[j][:, None]
            wh2 = support @ a2[j][:, None]
            e = jax.nn.leaky_relu(wh1 + wh2.T, ALPHA)
            masked = jnp.where(adj[j, i] > 0, e, NEG_INF)
            attn = jax.nn.softmax(masked, axis=1)
            acc = acc + attn @ support
        outs.append(acc)
    out = jax.nn.relu(jnp.stack(outs, axis=1))
    transform = jax.nn.sigmoid(jnp.einsum("ntf,fo->nto", x, whw) + bhw)
    return out * transform + x * (1.0 - transform)


def gat_reference(inputs, adj, layer_params):
    def single(x, a):
        feats = x
        for p in layer_params:
            feats = _gcn_layer_reference(feats, a, p)   # inter-layer dropout = identity (eval)
        return feats
    return jax.vmap(single)(inputs, adj)


def init_params(key):
    """Deterministic parameter init mirroring reset_parameters() / xavier_uniform_."""
    k_w, k_b, k_a, k_whw, k_bhw = jax.random.split(key, 5)
    stdv = 1.0 / math.sqrt(F_IN)
    w = jax.random.uniform(k_w, (N_EDGE, F_IN, F_OUT), jnp.float32, -stdv, stdv)
    b = jax.random.uniform(k_b, (N_EDGE, 1, F_OUT), jnp.float32, -stdv, stdv)
    # xavier_uniform_ on (3, 2*F_out, 1): fan_in = 2*F_out, fan_out = 3, gain = 1.414
    bound = 1.414 * math.sqrt(6.0 / (2 * F_OUT + 3))
    a = jax.random.uniform(k_a, (N_EDGE, 2 * F_OUT, 1), jnp.float32, -bound, bound)
    a1 = a[:, :F_OUT, 0]
    a2 = a[:, F_OUT:, 0]
    # weight_highway / bias_highway are uninitialized torch.Tensors in the module;
    # initialized deterministically here (synthetic weights, no checkpoint).
    whw = jax.random.uniform(k_whw, (F_IN, F_OUT), jnp.float32, -stdv, stdv)
    bhw = jax.random.uniform(k_bhw, (1, F_OUT), jnp.float32, -stdv, stdv)
    return (w, b, a1, a2, whw, bhw)


if __name__ == "__main__":
    # TODO(synk): training-mode dropout (dropout / edge_dropout / attn_dropout) is not
    # implemented; all dropout layers are eval-mode identities as in the tested config.
    key = jax.random.PRNGKey(0)
    k_layers, k_x, k_adj = jax.random.split(key, 3)
    layer_params = [init_params(k) for k in jax.random.split(k_layers, N_LAYERS)]

    inputs = jax.random.normal(k_x, (B, N_NODES, T, F_IN), jnp.float32)
    # Random binary adjacency per graph, edge type and slice, with self loops.
    adj = (jax.random.uniform(k_adj, (B, N_EDGE, T, N_NODES, N_NODES)) > 0.5).astype(jnp.float32)
    adj = jnp.maximum(adj, jnp.eye(N_NODES, dtype=jnp.float32))

    out = jax.block_until_ready(gat_forward(inputs, adj, layer_params))
    ref = gat_reference(inputs, adj, layer_params)

    assert out.shape == (B, N_NODES, T, F_OUT)
    assert bool(jnp.all(jnp.isfinite(out)))
    # Documented deviation (per review): bf16 MXU operands (front matmuls + fused
    # attn@support) and the EUP approx reciprocal in the softmax widen the numeric
    # envelope slightly vs the pure-f32 reference.
    maxdiff = float(jnp.max(jnp.abs(out - ref)))
    assert bool(jnp.allclose(out, ref, rtol=3e-2, atol=3e-2)), f"max abs diff {maxdiff}"

    print("KERNEL_OK")
</pallas_src>

<mosaic_0001>
module attributes {stable_mosaic.version = 11 : i64} {
  func.func @_gat_kernel(%arg0: i32, %arg1: memref<1x8x128xf32, #tpu.memory_space<vmem>>, %arg2: memref<1x8x96xf32, #tpu.memory_space<vmem>>, %arg3: memref<2x32x128xbf16, #tpu.memory_space<vmem>>, %arg4: memref<2x1x128xf32, #tpu.memory_space<vmem>>, %arg5: memref<2x128x96xbf16, #tpu.memory_space<vmem>>, %arg6: memref<2x1x96xf32, #tpu.memory_space<vmem>>, %arg7: memref<2x32x8xbf16, #tpu.memory_space<vmem>>, %arg8: memref<2x1x8xf32, #tpu.memory_space<vmem>>, %arg9: memref<1x8x128xf32, #tpu.memory_space<vmem>>) attributes {dimension_semantics = [#tpu.dimension_semantics<parallel>], iteration_bounds = array<i64: 2>, scalar_prefetch = 0 : i64, scratch_operands = 0 : i64, tpu.core_type = #tpu.core_type<tc>, window_params = [{transform_indices = @transform_0, window_bounds = array<i64: 1, 8, 128>}, {transform_indices = @transform_1, window_bounds = array<i64: 1, 8, 96>}, {pipeline_mode = #tpu.pipeline_mode<synchronous>, transform_indices = @transform_2, window_bounds = array<i64: 2, 32, 128>}, {pipeline_mode = #tpu.pipeline_mode<synchronous>, transform_indices = @transform_3, window_bounds = array<i64: 2, 1, 128>}, {pipeline_mode = #tpu.pipeline_mode<synchronous>, transform_indices = @transform_4, window_bounds = array<i64: 2, 128, 96>}, {pipeline_mode = #tpu.pipeline_mode<synchronous>, transform_indices = @transform_5, window_bounds = array<i64: 2, 1, 96>}, {pipeline_mode = #tpu.pipeline_mode<synchronous>, transform_indices = @transform_6, window_bounds = array<i64: 2, 32, 8>}, {pipeline_mode = #tpu.pipeline_mode<synchronous>, transform_indices = @transform_7, window_bounds = array<i64: 2, 1, 8>}, {transform_indices = @transform_8, window_bounds = array<i64: 1, 8, 128>}]} {
    %c0 = arith.constant 0 : index
    %c0_0 = arith.constant 0 : index
    %c0_1 = arith.constant 0 : index
    %0 = vector.load %arg1[%c0, %c0_0, %c0_1] : memref<1x8x128xf32, #tpu.memory_space<vmem>>, vector<1x8x128xf32>
    %1 = vector.shape_cast %0 : vector<1x8x128xf32> to vector<8x128xf32>
    %c0_2 = arith.constant 0 : index
    %c0_3 = arith.constant 0 : index
    %c0_4 = arith.constant 0 : index
    %2 = vector.load %arg2[%c0_2, %c0_3, %c0_4] : memref<1x8x96xf32, #tpu.memory_space<vmem>>, vector<1x8x96xf32>
    %3 = vector.shape_cast %2 : vector<1x8x96xf32> to vector<8x96xf32>
    %4 = vector.extract_strided_slice %1 {offsets = [0, 0], sizes = [8, 32], strides = [1, 1]} : vector<8x128xf32> to vector<8x32xf32>
    %5 = vector.extract_strided_slice %1 {offsets = [0, 32], sizes = [8, 32], strides = [1, 1]} : vector<8x128xf32> to vector<8x32xf32>
    %6 = vector.extract_strided_slice %1 {offsets = [0, 64], sizes = [8, 32], strides = [1, 1]} : vector<8x128xf32> to vector<8x32xf32>
    %7 = vector.extract_strided_slice %1 {offsets = [0, 96], sizes = [8, 32], strides = [1, 1]} : vector<8x128xf32> to vector<8x32xf32>
    %8 = tpu.concatenate %4, %5, %6, %7 in 0 : vector<8x32xf32>, vector<8x32xf32>, vector<8x32xf32>, vector<8x32xf32> -> vector<32x32xf32>
    %9 = arith.truncf %8 : vector<32x32xf32> to vector<32x32xbf16>
    %10 = arith.truncf %1 : vector<8x128xf32> to vector<8x128xbf16>
    %c0_5 = arith.constant 0 : index
    %c0_6 = arith.constant 0 : index
    %c0_7 = arith.constant 0 : index
    %11 = vector.load %arg3[%c0_5, %c0_6, %c0_7] : memref<2x32x128xbf16, #tpu.memory_space<vmem>>, vector<1x32x128xbf16>
    %12 = vector.shape_cast %11 : vector<1x32x128xbf16> to vector<32x128xbf16>
    %cst = arith.constant dense<0.000000e+00> : vector<32x128xf32>
    %13 = tpu.matmul %9, %12, %cst {dimension_numbers = #tpu.dot_dimension_numbers<[1], [0], [0], [1], [0, 0, 1, 1], [], []>} : vector<32x32xbf16>, vector<32x128xbf16>, vector<32x128xf32> -> vector<32x128xf32>
    %c0_8 = arith.constant 0 : index
    %c0_9 = arith.constant 0 : index
    %c0_10 = arith.constant 0 : index
    %14 = vector.load %arg4[%c0_8, %c0_9, %c0_10] : memref<2x1x128xf32, #tpu.memory_space<vmem>>, vector<1x1x128xf32>
    %15 = vector.shape_cast %14 : vector<1x1x128xf32> to vector<1x128xf32>
    %16 = vector.broadcast %15 : vector<1x128xf32> to vector<32x128xf32>
    %17 = arith.addf %13, %16 : vector<32x128xf32>
    %c0_11 = arith.constant 0 : index
    %c0_12 = arith.constant 0 : index
    %c0_13 = arith.constant 0 : index
    %18 = vector.load %arg5[%c0_11, %c0_12, %c0_13] : memref<2x128x96xbf16, #tpu.memory_space<vmem>>, vector<1x128x96xbf16>
    %19 = vector.shape_cast %18 : vector<1x128x96xbf16> to vector<128x96xbf16>
    %cst_14 = arith.constant dense<0.000000e+00> : vector<8x96xf32>
    %20 = tpu.matmul %10, %19, %cst_14 {dimension_numbers = #tpu.dot_dimension_numbers<[1], [0], [0], [1], [0, 0, 1, 1], [], []>} : vector<8x128xbf16>, vector<128x96xbf16>, vector<8x96xf32> -> vector<8x96xf32>
    %c0_15 = arith.constant 0 : index
    %c0_16 = arith.constant 0 : index
    %c0_17 = arith.constant 0 : index
    %21 = vector.load %arg6[%c0_15, %c0_16, %c0_17] : memref<2x1x96xf32, #tpu.memory_space<vmem>>, vector<1x1x96xf32>
    %22 = vector.shape_cast %21 : vector<1x1x96xf32> to vector<1x96xf32>
    %23 = vector.broadcast %22 : vector<1x96xf32> to vector<8x96xf32>
    %24 = arith.addf %20, %23 : vector<8x96xf32>
    %c0_18 = arith.constant 0 : index
    %c0_19 = arith.constant 0 : index
    %c0_20 = arith.constant 0 : index
    %25 = vector.load %arg7[%c0_18, %c0_19, %c0_20] : memref<2x32x8xbf16, #tpu.memory_space<vmem>>, vector<1x32x8xbf16>
    %26 = vector.shape_cast %25 : vector<1x32x8xbf16> to vector<32x8xbf16>
    %cst_21 = arith.constant dense<0.000000e+00> : vector<32x8xf32>
    %27 = tpu.matmul %9, %26, %cst_21 {dimension_numbers = #tpu.dot_dimension_numbers<[1], [0], [0], [1], [0, 0, 1, 1], [], []>} : vector<32x32xbf16>, vector<32x8xbf16>, vector<32x8xf32> -> vector<32x8xf32>
    %c0_22 = arith.constant 0 : index
    %c0_23 = arith.constant 0 : index
    %c0_24 = arith.constant 0 : index
    %28 = vector.load %arg8[%c0_22, %c0_23, %c0_24] : memref<2x1x8xf32, #tpu.memory_space<vmem>>, vector<1x1x8xf32>
    %29 = vector.shape_cast %28 : vector<1x1x8xf32> to vector<1x8xf32>
    %30 = vector.broadcast %29 : vector<1x8xf32> to vector<32x8xf32>
    %31 = arith.addf %27, %30 : vector<32x8xf32>
    %32 = tpu.transpose %31, [1, 0] : vector<32x8xf32> -> vector<8x32xf32>
    %33 = vector.extract_strided_slice %32 {offsets = [0, 0], sizes = [1, 32], strides = [1, 1]} : vector<8x32xf32> to vector<1x32xf32>
    %34 = vector.extract_strided_slice %32 {offsets = [1, 0], sizes = [1, 32], strides = [1, 1]} : vector<8x32xf32> to vector<1x32xf32>
    %35 = vector.extract_strided_slice %32 {offsets = [2, 0], sizes = [1, 32], strides = [1, 1]} : vector<8x32xf32> to vector<1x32xf32>
    %36 = tpu.concatenate %33, %34, %35 in 1 : vector<1x32xf32>, vector<1x32xf32>, vector<1x32xf32> -> vector<1x96xf32>
    %37 = vector.broadcast %36 : vector<1x96xf32> to vector<8x96xf32>
    %38 = arith.addf %37, %24 : vector<8x96xf32>
    %cst_25 = arith.constant 0.000000e+00 : f32
    %39 = vector.broadcast %cst_25 : f32 to vector<8x96xf32>
    %40 = arith.cmpf ogt, %38, %39 : vector<8x96xf32>
    %cst_26 = arith.constant 2.000000e-01 : f32
    %41 = vector.broadcast %cst_26 : f32 to vector<8x96xf32>
    %42 = arith.mulf %41, %38 : vector<8x96xf32>
    %43 = arith.select %40, %38, %42 : vector<8x96xi1>, vector<8x96xf32>
    %44 = arith.addf %43, %3 : vector<8x96xf32>
    %cst_27 = arith.constant dense<0xFF800000> : vector<96xf32>
    %45 = vector.multi_reduction <maximumf>, %44, %cst_27 [0] : vector<8x96xf32> to vector<96xf32>
    %46 = vector.shape_cast %45 : vector<96xf32> to vector<1x96xf32>
    %47 = vector.broadcast %46 : vector<1x96xf32> to vector<8x96xf32>
    %48 = arith.subf %44, %47 : vector<8x96xf32>
    %49 = math.exp %48 : vector<8x96xf32>
    %cst_28 = arith.constant dense<0.000000e+00> : vector<96xf32>
    %50 = vector.multi_reduction <add>, %49, %cst_28 [0] : vector<8x96xf32> to vector<96xf32>
    %51 = vector.shape_cast %50 : vector<96xf32> to vector<1x96xf32>
    %52 = tpu.reciprocal %51 {approx = true} : vector<1x96xf32> -> vector<1x96xf32>
    %53 = vector.broadcast %52 : vector<1x96xf32> to vector<8x96xf32>
    %54 = arith.mulf %49, %53 : vector<8x96xf32>
    %55 = tpu.transpose %54, [1, 0] : vector<8x96xf32> -> vector<96x8xf32>
    %56 = vector.extract_strided_slice %55 {offsets = [0, 0], sizes = [8, 8], strides = [1, 1]} : vector<96x8xf32> to vector<8x8xf32>
    %57 = vector.extract_strided_slice %55 {offsets = [32, 0], sizes = [8, 8], strides = [1, 1]} : vector<96x8xf32> to vector<8x8xf32>
    %58 = vector.extract_strided_slice %55 {offsets = [64, 0], sizes = [8, 8], strides = [1, 1]} : vector<96x8xf32> to vector<8x8xf32>
    %59 = tpu.concatenate %56, %57, %58 in 1 : vector<8x8xf32>, vector<8x8xf32>, vector<8x8xf32> -> vector<8x24xf32>
    %60 = vector.extract_strided_slice %17 {offsets = [0, 0], sizes = [8, 32], strides = [1, 1]} : vector<32x128xf32> to vector<8x32xf32>
    %61 = vector.extract_strided_slice %17 {offsets = [0, 32], sizes = [8, 32], strides = [1, 1]} : vector<32x128xf32> to vector<8x32xf32>
    %62 = vector.extract_strided_slice %17 {offsets = [0, 64], sizes = [8, 32], strides = [1, 1]} : vector<32x128xf32> to vector<8x32xf32>
    %63 = tpu.concatenate %60, %61, %62 in 0 : vector<8x32xf32>, vector<8x32xf32>, vector<8x32xf32> -> vector<24x32xf32>
    %64 = arith.truncf %59 : vector<8x24xf32> to vector<8x24xbf16>
    %65 = arith.truncf %63 : vector<24x32xf32> to vector<24x32xbf16>
    %cst_29 = arith.constant dense<0.000000e+00> : vector<8x32xf32>
    %66 = tpu.matmul %64, %65, %cst_29 {dimension_numbers = #tpu.dot_dimension_numbers<[1], [0], [0], [1], [0, 0, 1, 1], [], []>} : vector<8x24xbf16>, vector<24x32xbf16>, vector<8x32xf32> -> vector<8x32xf32>
    %67 = vector.extract_strided_slice %55 {offsets = [8, 0], sizes = [8, 8], strides = [1, 1]} : vector<96x8xf32> to vector<8x8xf32>
    %68 = vector.extract_strided_slice %55 {offsets = [40, 0], sizes = [8, 8], strides = [1, 1]} : vector<96x8xf32> to vector<8x8xf32>
    %69 = vector.extract_strided_slice %55 {offsets = [72, 0], sizes = [8, 8], strides = [1, 1]} : vector<96x8xf32> to vector<8x8xf32>
    %70 = tpu.concatenate %67, %68, %69 in 1 : vector<8x8xf32>, vector<8x8xf32>, vector<8x8xf32> -> vector<8x24xf32>
    %71 = vector.extract_strided_slice %17 {offsets = [8, 0], sizes = [8, 32], strides = [1, 1]} : vector<32x128xf32> to vector<8x32xf32>
    %72 = vector.extract_strided_slice %17 {offsets = [8, 32], sizes = [8, 32], strides = [1, 1]} : vector<32x128xf32> to vector<8x32xf32>
    %73 = vector.extract_strided_slice %17 {offsets = [8, 64], sizes = [8, 32], strides = [1, 1]} : vector<32x128xf32> to vector<8x32xf32>
    %74 = tpu.concatenate %71, %72, %73 in 0 : vector<8x32xf32>, vector<8x32xf32>, vector<8x32xf32> -> vector<24x32xf32>
    %75 = arith.truncf %70 : vector<8x24xf32> to vector<8x24xbf16>
    %76 = arith.truncf %74 : vector<24x32xf32> to vector<24x32xbf16>
    %cst_30 = arith.constant dense<0.000000e+00> : vector<8x32xf32>
    %77 = tpu.matmul %75, %76, %cst_30 {dimension_numbers = #tpu.dot_dimension_numbers<[1], [0], [0], [1], [0, 0, 1, 1], [], []>} : vector<8x24xbf16>, vector<24x32xbf16>, vector<8x32xf32> -> vector<8x32xf32>
    %78 = vector.extract_strided_slice %55 {offsets = [16, 0], sizes = [8, 8], strides = [1, 1]} : vector<96x8xf32> to vector<8x8xf32>
    %79 = vector.extract_strided_slice %55 {offsets = [48, 0], sizes = [8, 8], strides = [1, 1]} : vector<96x8xf32> to vector<8x8xf32>
    %80 = vector.extract_strided_slice %55 {offsets = [80, 0], sizes = [8, 8], strides = [1, 1]} : vector<96x8xf32> to vector<8x8xf32>
    %81 = tpu.concatenate %78, %79, %80 in 1 : vector<8x8xf32>, vector<8x8xf32>, vector<8x8xf32> -> vector<8x24xf32>
    %82 = vector.extract_strided_slice %17 {offsets = [16, 0], sizes = [8, 32], strides = [1, 1]} : vector<32x128xf32> to vector<8x32xf32>
    %83 = vector.extract_strided_slice %17 {offsets = [16, 32], sizes = [8, 32], strides = [1, 1]} : vector<32x128xf32> to vector<8x32xf32>
    %84 = vector.extract_strided_slice %17 {offsets = [16, 64], sizes = [8, 32], strides = [1, 1]} : vector<32x128xf32> to vector<8x32xf32>
    %85 = tpu.concatenate %82, %83, %84 in 0 : vector<8x32xf32>, vector<8x32xf32>, vector<8x32xf32> -> vector<24x32xf32>
    %86 = arith.truncf %81 : vector<8x24xf32> to vector<8x24xbf16>
    %87 = arith.truncf %85 : vector<24x32xf32> to vector<24x32xbf16>
    %cst_31 = arith.constant dense<0.000000e+00> : vector<8x32xf32>
    %88 = tpu.matmul %86, %87, %cst_31 {dimension_numbers = #tpu.dot_dimension_numbers<[1], [0], [0], [1], [0, 0, 1, 1], [], []>} : vector<8x24xbf16>, vector<24x32xbf16>, vector<8x32xf32> -> vector<8x32xf32>
    %89 = vector.extract_strided_slice %55 {offsets = [24, 0], sizes = [8, 8], strides = [1, 1]} : vector<96x8xf32> to vector<8x8xf32>
    %90 = vector.extract_strided_slice %55 {offsets = [56, 0], sizes = [8, 8], strides = [1, 1]} : vector<96x8xf32> to vector<8x8xf32>
    %91 = vector.extract_strided_slice %55 {offsets = [88, 0], sizes = [8, 8], strides = [1, 1]} : vector<96x8xf32> to vector<8x8xf32>
    %92 = tpu.concatenate %89, %90, %91 in 1 : vector<8x8xf32>, vector<8x8xf32>, vector<8x8xf32> -> vector<8x24xf32>
    %93 = vector.extract_strided_slice %17 {offsets = [24, 0], sizes = [8, 32], strides = [1, 1]} : vector<32x128xf32> to vector<8x32xf32>
    %94 = vector.extract_strided_slice %17 {offsets = [24, 32], sizes = [8, 32], strides = [1, 1]} : vector<32x128xf32> to vector<8x32xf32>
    %95 = vector.extract_strided_slice %17 {offsets = [24, 64], sizes = [8, 32], strides = [1, 1]} : vector<32x128xf32> to vector<8x32xf32>
    %96 = tpu.concatenate %93, %94, %95 in 0 : vector<8x32xf32>, vector<8x32xf32>, vector<8x32xf32> -> vector<24x32xf32>
    %97 = arith.truncf %92 : vector<8x24xf32> to vector<8x24xbf16>
    %98 = arith.truncf %96 : vector<24x32xf32> to vector<24x32xbf16>
    %cst_32 = arith.constant dense<0.000000e+00> : vector<8x32xf32>
    %99 = tpu.matmul %97, %98, %cst_32 {dimension_numbers = #tpu.dot_dimension_numbers<[1], [0], [0], [1], [0, 0, 1, 1], [], []>} : vector<8x24xbf16>, vector<24x32xbf16>, vector<8x32xf32> -> vector<8x32xf32>
    %100 = tpu.concatenate %66, %77, %88, %99 in 0 : vector<8x32xf32>, vector<8x32xf32>, vector<8x32xf32>, vector<8x32xf32> -> vector<32x32xf32>
    %cst_33 = arith.constant 0.000000e+00 : f32
    %101 = vector.broadcast %cst_33 : f32 to vector<32x32xf32>
    %102 = arith.maximumf %100, %101 : vector<32x32xf32>
    %103 = vector.extract_strided_slice %17 {offsets = [0, 96], sizes = [32, 32], strides = [1, 1]} : vector<32x128xf32> to vector<32x32xf32>
    %104 = arith.negf %103 : vector<32x32xf32>
    %105 = math.exp %104 : vector<32x32xf32>
    %cst_34 = arith.constant 1.000000e+00 : f32
    %106 = vector.broadcast %cst_34 : f32 to vector<32x32xf32>
    %107 = arith.addf %106, %105 : vector<32x32xf32>
    %108 = arith.divf %106, %107 : vector<32x32xf32>
    %109 = arith.mulf %102, %108 : vector<32x32xf32>
    %cst_35 = arith.constant 1.000000e+00 : f32
    %110 = vector.broadcast %cst_35 : f32 to vector<32x32xf32>
    %111 = arith.subf %110, %108 : vector<32x32xf32>
    %112 = arith.mulf %8, %111 : vector<32x32xf32>
    %113 = arith.addf %109, %112 : vector<32x32xf32>
    %114 = vector.extract_strided_slice %113 {offsets = [0, 0], sizes = [8, 32], strides = [1, 1]} : vector<32x32xf32> to vector<8x32xf32>
    %115 = vector.extract_strided_slice %113 {offsets = [8, 0], sizes = [8, 32], strides = [1, 1]} : vector<32x32xf32> to vector<8x32xf32>
    %116 = vector.extract_strided_slice %113 {offsets = [16, 0], sizes = [8, 32], strides = [1, 1]} : vector<32x32xf32> to vector<8x32xf32>
    %117 = vector.extract_strided_slice %113 {offsets = [24, 0], sizes = [8, 32], strides = [1, 1]} : vector<32x32xf32> to vector<8x32xf32>
    %118 = tpu.concatenate %114, %115, %116, %117 in 1 : vector<8x32xf32>, vector<8x32xf32>, vector<8x32xf32>, vector<8x32xf32> -> vector<8x128xf32>
    %119 = arith.truncf %113 : vector<32x32xf32> to vector<32x32xbf16>
    %120 = arith.truncf %118 : vector<8x128xf32> to vector<8x128xbf16>
    %c1 = arith.constant 1 : index
    %c0_36 = arith.constant 0 : index
    %c0_37 = arith.constant 0 : index
    %121 = vector.load %arg3[%c1, %c0_36, %c0_37] : memref<2x32x128xbf16, #tpu.memory_space<vmem>>, vector<1x32x128xbf16>
    %122 = vector.shape_cast %121 : vector<1x32x128xbf16> to vector<32x128xbf16>
    %cst_38 = arith.constant dense<0.000000e+00> : vector<32x128xf32>
    %123 = tpu.matmul %119, %122, %cst_38 {dimension_numbers = #tpu.dot_dimension_numbers<[1], [0], [0], [1], [0, 0, 1, 1], [], []>} : vector<32x32xbf16>, vector<32x128xbf16>, vector<32x128xf32> -> vector<32x128xf32>
    %c1_39 = arith.constant 1 : index
    %c0_40 = arith.constant 0 : index
    %c0_41 = arith.constant 0 : index
    %124 = vector.load %arg4[%c1_39, %c0_40, %c0_41] : memref<2x1x128xf32, #tpu.memory_space<vmem>>, vector<1x1x128xf32>
    %125 = vector.shape_cast %124 : vector<1x1x128xf32> to vector<1x128xf32>
    %126 = vector.broadcast %125 : vector<1x128xf32> to vector<32x128xf32>
    %127 = arith.addf %123, %126 : vector<32x128xf32>
    %c1_42 = arith.constant 1 : index
    %c0_43 = arith.constant 0 : index
    %c0_44 = arith.constant 0 : index
    %128 = vector.load %arg5[%c1_42, %c0_43, %c0_44] : memref<2x128x96xbf16, #tpu.memory_space<vmem>>, vector<1x128x96xbf16>
    %129 = vector.shape_cast %128 : vector<1x128x96xbf16> to vector<128x96xbf16>
    %cst_45 = arith.constant dense<0.000000e+00> : vector<8x96xf32>
    %130 = tpu.matmul %120, %129, %cst_45 {dimension_numbers = #tpu.dot_dimension_numbers<[1], [0], [0], [1], [0, 0, 1, 1], [], []>} : vector<8x128xbf16>, vector<128x96xbf16>, vector<8x96xf32> -> vector<8x96xf32>
    %c1_46 = arith.constant 1 : index
    %c0_47 = arith.constant 0 : index
    %c0_48 = arith.constant 0 : index
    %131 = vector.load %arg6[%c1_46, %c0_47, %c0_48] : memref<2x1x96xf32, #tpu.memory_space<vmem>>, vector<1x1x96xf32>
    %132 = vector.shape_cast %131 : vector<1x1x96xf32> to vector<1x96xf32>
    %133 = vector.broadcast %132 : vector<1x96xf32> to vector<8x96xf32>
    %134 = arith.addf %130, %133 : vector<8x96xf32>
    %c1_49 = arith.constant 1 : index
    %c0_50 = arith.constant 0 : index
    %c0_51 = arith.constant 0 : index
    %135 = vector.load %arg7[%c1_49, %c0_50, %c0_51] : memref<2x32x8xbf16, #tpu.memory_space<vmem>>, vector<1x32x8xbf16>
    %136 = vector.shape_cast %135 : vector<1x32x8xbf16> to vector<32x8xbf16>
    %cst_52 = arith.constant dense<0.000000e+00> : vector<32x8xf32>
    %137 = tpu.matmul %119, %136, %cst_52 {dimension_numbers = #tpu.dot_dimension_numbers<[1], [0], [0], [1], [0, 0, 1, 1], [], []>} : vector<32x32xbf16>, vector<32x8xbf16>, vector<32x8xf32> -> vector<32x8xf32>
    %c1_53 = arith.constant 1 : index
    %c0_54 = arith.constant 0 : index
    %c0_55 = arith.constant 0 : index
    %138 = vector.load %arg8[%c1_53, %c0_54, %c0_55] : memref<2x1x8xf32, #tpu.memory_space<vmem>>, vector<1x1x8xf32>
    %139 = vector.shape_cast %138 : vector<1x1x8xf32> to vector<1x8xf32>
    %140 = vector.broadcast %139 : vector<1x8xf32> to vector<32x8xf32>
    %141 = arith.addf %137, %140 : vector<32x8xf32>
    %142 = tpu.transpose %141, [1, 0] : vector<32x8xf32> -> vector<8x32xf32>
    %143 = vector.extract_strided_slice %142 {offsets = [0, 0], sizes = [1, 32], strides = [1, 1]} : vector<8x32xf32> to vector<1x32xf32>
    %144 = vector.extract_strided_slice %142 {offsets = [1, 0], sizes = [1, 32], strides = [1, 1]} : vector<8x32xf32> to vector<1x32xf32>
    %145 = vector.extract_strided_slice %142 {offsets = [2, 0], sizes = [1, 32], strides = [1, 1]} : vector<8x32xf32> to vector<1x32xf32>
    %146 = tpu.concatenate %143, %144, %145 in 1 : vector<1x32xf32>, vector<1x32xf32>, vector<1x32xf32> -> vector<1x96xf32>
    %147 = vector.broadcast %146 : vector<1x96xf32> to vector<8x96xf32>
    %148 = arith.addf %147, %134 : vector<8x96xf32>
    %cst_56 = arith.constant 0.000000e+00 : f32
    %149 = vector.broadcast %cst_56 : f32 to vector<8x96xf32>
    %150 = arith.cmpf ogt, %148, %149 : vector<8x96xf32>
    %cst_57 = arith.constant 2.000000e-01 : f32
    %151 = vector.broadcast %cst_57 : f32 to vector<8x96xf32>
    %152 = arith.mulf %151, %148 : vector<8x96xf32>
    %153 = arith.select %150, %148, %152 : vector<8x96xi1>, vector<8x96xf32>
    %154 = arith.addf %153, %3 : vector<8x96xf32>
    %cst_58 = arith.constant dense<0xFF800000> : vector<96xf32>
    %155 = vector.multi_reduction <maximumf>, %154, %cst_58 [0] : vector<8x96xf32> to vector<96xf32>
    %156 = vector.shape_cast %155 : vector<96xf32> to vector<1x96xf32>
    %157 = vector.broadcast %156 : vector<1x96xf32> to vector<8x96xf32>
    %158 = arith.subf %154, %157 : vector<8x96xf32>
    %159 = math.exp %158 : vector<8x96xf32>
    %cst_59 = arith.constant dense<0.000000e+00> : vector<96xf32>
    %160 = vector.multi_reduction <add>, %159, %cst_59 [0] : vector<8x96xf32> to vector<96xf32>
    %161 = vector.shape_cast %160 : vector<96xf32> to vector<1x96xf32>
    %162 = tpu.reciprocal %161 {approx = true} : vector<1x96xf32> -> vector<1x96xf32>
    %163 = vector.broadcast %162 : vector<1x96xf32> to vector<8x96xf32>
    %164 = arith.mulf %159, %163 : vector<8x96xf32>
    %165 = tpu.transpose %164, [1, 0] : vector<8x96xf32> -> vector<96x8xf32>
    %166 = vector.extract_strided_slice %165 {offsets = [0, 0], sizes = [8, 8], strides = [1, 1]} : vector<96x8xf32> to vector<8x8xf32>
    %167 = vector.extract_strided_slice %165 {offsets = [32, 0], sizes = [8, 8], strides = [1, 1]} : vector<96x8xf32> to vector<8x8xf32>
    %168 = vector.extract_strided_slice %165 {offsets = [64, 0], sizes = [8, 8], strides = [1, 1]} : vector<96x8xf32> to vector<8x8xf32>
    %169 = tpu.concatenate %166, %167, %168 in 1 : vector<8x8xf32>, vector<8x8xf32>, vector<8x8xf32> -> vector<8x24xf32>
    %170 = vector.extract_strided_slice %127 {offsets = [0, 0], sizes = [8, 32], strides = [1, 1]} : vector<32x128xf32> to vector<8x32xf32>
    %171 = vector.extract_strided_slice %127 {offsets = [0, 32], sizes = [8, 32], strides = [1, 1]} : vector<32x128xf32> to vector<8x32xf32>
    %172 = vector.extract_strided_slice %127 {offsets = [0, 64], sizes = [8, 32], strides = [1, 1]} : vector<32x128xf32> to vector<8x32xf32>
    %173 = tpu.concatenate %170, %171, %172 in 0 : vector<8x32xf32>, vector<8x32xf32>, vector<8x32xf32> -> vector<24x32xf32>
    %174 = arith.truncf %169 : vector<8x24xf32> to vector<8x24xbf16>
    %175 = arith.truncf %173 : vector<24x32xf32> to vector<24x32xbf16>
    %cst_60 = arith.constant dense<0.000000e+00> : vector<8x32xf32>
    %176 = tpu.matmul %174, %175, %cst_60 {dimension_numbers = #tpu.dot_dimension_numbers<[1], [0], [0], [1], [0, 0, 1, 1], [], []>} : vector<8x24xbf16>, vector<24x32xbf16>, vector<8x32xf32> -> vector<8x32xf32>
    %177 = vector.extract_strided_slice %165 {offsets = [8, 0], sizes = [8, 8], strides = [1, 1]} : vector<96x8xf32> to vector<8x8xf32>
    %178 = vector.extract_strided_slice %165 {offsets = [40, 0], sizes = [8, 8], strides = [1, 1]} : vector<96x8xf32> to vector<8x8xf32>
    %179 = vector.extract_strided_slice %165 {offsets = [72, 0], sizes = [8, 8], strides = [1, 1]} : vector<96x8xf32> to vector<8x8xf32>
    %180 = tpu.concatenate %177, %178, %179 in 1 : vector<8x8xf32>, vector<8x8xf32>, vector<8x8xf32> -> vector<8x24xf32>
    %181 = vector.extract_strided_slice %127 {offsets = [8, 0], sizes = [8, 32], strides = [1, 1]} : vector<32x128xf32> to vector<8x32xf32>
    %182 = vector.extract_strided_slice %127 {offsets = [8, 32], sizes = [8, 32], strides = [1, 1]} : vector<32x128xf32> to vector<8x32xf32>
    %183 = vector.extract_strided_slice %127 {offsets = [8, 64], sizes = [8, 32], strides = [1, 1]} : vector<32x128xf32> to vector<8x32xf32>
    %184 = tpu.concatenate %181, %182, %183 in 0 : vector<8x32xf32>, vector<8x32xf32>, vector<8x32xf32> -> vector<24x32xf32>
    %185 = arith.truncf %180 : vector<8x24xf32> to vector<8x24xbf16>
    %186 = arith.truncf %184 : vector<24x32xf32> to vector<24x32xbf16>
    %cst_61 = arith.constant dense<0.000000e+00> : vector<8x32xf32>
    %187 = tpu.matmul %185, %186, %cst_61 {dimension_numbers = #tpu.dot_dimension_numbers<[1], [0], [0], [1], [0, 0, 1, 1], [], []>} : vector<8x24xbf16>, vector<24x32xbf16>, vector<8x32xf32> -> vector<8x32xf32>
    %188 = vector.extract_strided_slice %165 {offsets = [16, 0], sizes = [8, 8], strides = [1, 1]} : vector<96x8xf32> to vector<8x8xf32>
    %189 = vector.extract_strided_slice %165 {offsets = [48, 0], sizes = [8, 8], strides = [1, 1]} : vector<96x8xf32> to vector<8x8xf32>
    %190 = vector.extract_strided_slice %165 {offsets = [80, 0], sizes = [8, 8], strides = [1, 1]} : vector<96x8xf32> to vector<8x8xf32>
    %191 = tpu.concatenate %188, %189, %190 in 1 : vector<8x8xf32>, vector<8x8xf32>, vector<8x8xf32> -> vector<8x24xf32>
    %192 = vector.extract_strided_slice %127 {offsets = [16, 0], sizes = [8, 32], strides = [1, 1]} : vector<32x128xf32> to vector<8x32xf32>
    %193 = vector.extract_strided_slice %127 {offsets = [16, 32], sizes = [8, 32], strides = [1, 1]} : vector<32x128xf32> to vector<8x32xf32>
    %194 = vector.extract_strided_slice %127 {offsets = [16, 64], sizes = [8, 32], strides = [1, 1]} : vector<32x128xf32> to vector<8x32xf32>
    %195 = tpu.concatenate %192, %193, %194 in 0 : vector<8x32xf32>, vector<8x32xf32>, vector<8x32xf32> -> vector<24x32xf32>
    %196 = arith.truncf %191 : vector<8x24xf32> to vector<8x24xbf16>
    %197 = arith.truncf %195 : vector<24x32xf32> to vector<24x32xbf16>
    %cst_62 = arith.constant dense<0.000000e+00> : vector<8x32xf32>
    %198 = tpu.matmul %196, %197, %cst_62 {dimension_numbers = #tpu.dot_dimension_numbers<[1], [0], [0], [1], [0, 0, 1, 1], [], []>} : vector<8x24xbf16>, vector<24x32xbf16>, vector<8x32xf32> -> vector<8x32xf32>
    %199 = vector.extract_strided_slice %165 {offsets = [24, 0], sizes = [8, 8], strides = [1, 1]} : vector<96x8xf32> to vector<8x8xf32>
    %200 = vector.extract_strided_slice %165 {offsets = [56, 0], sizes = [8, 8], strides = [1, 1]} : vector<96x8xf32> to vector<8x8xf32>
    %201 = vector.extract_strided_slice %165 {offsets = [88, 0], sizes = [8, 8], strides = [1, 1]} : vector<96x8xf32> to vector<8x8xf32>
    %202 = tpu.concatenate %199, %200, %201 in 1 : vector<8x8xf32>, vector<8x8xf32>, vector<8x8xf32> -> vector<8x24xf32>
    %203 = vector.extract_strided_slice %127 {offsets = [24, 0], sizes = [8, 32], strides = [1, 1]} : vector<32x128xf32> to vector<8x32xf32>
    %204 = vector.extract_strided_slice %127 {offsets = [24, 32], sizes = [8, 32], strides = [1, 1]} : vector<32x128xf32> to vector<8x32xf32>
    %205 = vector.extract_strided_slice %127 {offsets = [24, 64], sizes = [8, 32], strides = [1, 1]} : vector<32x128xf32> to vector<8x32xf32>
    %206 = tpu.concatenate %203, %204, %205 in 0 : vector<8x32xf32>, vector<8x32xf32>, vector<8x32xf32> -> vector<24x32xf32>
    %207 = arith.truncf %202 : vector<8x24xf32> to vector<8x24xbf16>
    %208 = arith.truncf %206 : vector<24x32xf32> to vector<24x32xbf16>
    %cst_63 = arith.constant dense<0.000000e+00> : vector<8x32xf32>
    %209 = tpu.matmul %207, %208, %cst_63 {dimension_numbers = #tpu.dot_dimension_numbers<[1], [0], [0], [1], [0, 0, 1, 1], [], []>} : vector<8x24xbf16>, vector<24x32xbf16>, vector<8x32xf32> -> vector<8x32xf32>
    %210 = tpu.concatenate %176, %187, %198, %209 in 0 : vector<8x32xf32>, vector<8x32xf32>, vector<8x32xf32>, vector<8x32xf32> -> vector<32x32xf32>
    %cst_64 = arith.constant 0.000000e+00 : f32
    %211 = vector.broadcast %cst_64 : f32 to vector<32x32xf32>
    %212 = arith.maximumf %210, %211 : vector<32x32xf32>
    %213 = vector.extract_strided_slice %127 {offsets = [0, 96], sizes = [32, 32], strides = [1, 1]} : vector<32x128xf32> to vector<32x32xf32>
    %214 = arith.negf %213 : vector<32x32xf32>
    %215 = math.exp %214 : vector<32x32xf32>
    %cst_65 = arith.constant 1.000000e+00 : f32
    %216 = vector.broadcast %cst_65 : f32 to vector<32x32xf32>
    %217 = arith.addf %216, %215 : vector<32x32xf32>
    %218 = arith.divf %216, %217 : vector<32x32xf32>
    %219 = arith.mulf %212, %218 : vector<32x32xf32>
    %cst_66 = arith.constant 1.000000e+00 : f32
    %220 = vector.broadcast %cst_66 : f32 to vector<32x32xf32>
    %221 = arith.subf %220, %218 : vector<32x32xf32>
    %222 = arith.mulf %113, %221 : vector<32x32xf32>
    %223 = arith.addf %219, %222 : vector<32x32xf32>
    %224 = vector.extract_strided_slice %223 {offsets = [0, 0], sizes = [8, 32], strides = [1, 1]} : vector<32x32xf32> to vector<8x32xf32>
    %225 = vector.extract_strided_slice %223 {offsets = [8, 0], sizes = [8, 32], strides = [1, 1]} : vector<32x32xf32> to vector<8x32xf32>
    %226 = vector.extract_strided_slice %223 {offsets = [16, 0], sizes = [8, 32], strides = [1, 1]} : vector<32x32xf32> to vector<8x32xf32>
    %227 = vector.extract_strided_slice %223 {offsets = [24, 0], sizes = [8, 32], strides = [1, 1]} : vector<32x32xf32> to vector<8x32xf32>
    %228 = tpu.concatenate %224, %225, %226, %227 in 1 : vector<8x32xf32>, vector<8x32xf32>, vector<8x32xf32>, vector<8x32xf32> -> vector<8x128xf32>
    %c0_67 = arith.constant 0 : index
    %c0_68 = arith.constant 0 : index
    %c0_69 = arith.constant 0 : index
    %229 = vector.load %arg9[%c0_67, %c0_68, %c0_69] : memref<1x8x128xf32, #tpu.memory_space<vmem>>, vector<1x8x128xf32>
    %230 = vector.shape_cast %229 : vector<1x8x128xf32> to vector<8x128xf32>
    %231 = vector.shape_cast %228 : vector<8x128xf32> to vector<1x8x128xf32>
    tpu.vector_store %arg9[%c0_67, %c0_68, %c0_69], %231 {strides = array<i32>} : memref<1x8x128xf32, #tpu.memory_space<vmem>>, vector<1x8x128xf32>,
    return
  }
  func.func @transform_0(%arg0: i32) -> (i32, i32, i32) {
    %c0_i32 = arith.constant 0 : i32
    %c0_i32_0 = arith.constant 0 : i32
    %c0_i32_1 = arith.constant 0 : i32
    return %arg0, %c0_i32, %c0_i32_0 : i32, i32, i32
  }
  func.func @transform_1(%arg0: i32) -> (i32, i32, i32) {
    %c0_i32 = arith.constant 0 : i32
    %c0_i32_0 = arith.constant 0 : i32
    %c0_i32_1 = arith.constant 0 : i32
    return %arg0, %c0_i32, %c0_i32_0 : i32, i32, i32
  }
  func.func @transform_2(%arg0: i32) -> (i32, i32, i32) {
    %c0_i32 = arith.constant 0 : i32
    %c0_i32_0 = arith.constant 0 : i32
    %c0_i32_1 = arith.constant 0 : i32
    %c0_i32_2 = arith.constant 0 : i32
    return %c0_i32, %c0_i32_0, %c0_i32_1 : i32, i32, i32
  }
  func.func @transform_3(%arg0: i32) -> (i32, i32, i32) {
    %c0_i32 = arith.constant 0 : i32
    %c0_i32_0 = arith.constant 0 : i32
    %c0_i32_1 = arith.constant 0 : i32
    %c0_i32_2 = arith.constant 0 : i32
    return %c0_i32, %c0_i32_0, %c0_i32_1 : i32, i32, i32
  }
  func.func @transform_4(%arg0: i32) -> (i32, i32, i32) {
    %c0_i32 = arith.constant 0 : i32
    %c0_i32_0 = arith.constant 0 : i32
    %c0_i32_1 = arith.constant 0 : i32
    %c0_i32_2 = arith.constant 0 : i32
    return %c0_i32, %c0_i32_0, %c0_i32_1 : i32, i32, i32
  }
  func.func @transform_5(%arg0: i32) -> (i32, i32, i32) {
    %c0_i32 = arith.constant 0 : i32
    %c0_i32_0 = arith.constant 0 : i32
    %c0_i32_1 = arith.constant 0 : i32
    %c0_i32_2 = arith.constant 0 : i32
    return %c0_i32, %c0_i32_0, %c0_i32_1 : i32, i32, i32
  }
  func.func @transform_6(%arg0: i32) -> (i32, i32, i32) {
    %c0_i32 = arith.constant 0 : i32
    %c0_i32_0 = arith.constant 0 : i32
    %c0_i32_1 = arith.constant 0 : i32
    %c0_i32_2 = arith.constant 0 : i32
    return %c0_i32, %c0_i32_0, %c0_i32_1 : i32, i32, i32
  }
  func.func @transform_7(%arg0: i32) -> (i32, i32, i32) {
    %c0_i32 = arith.constant 0 : i32
    %c0_i32_0 = arith.constant 0 : i32
    %c0_i32_1 = arith.constant 0 : i32
    %c0_i32_2 = arith.constant 0 : i32
    return %c0_i32, %c0_i32_0, %c0_i32_1 : i32, i32, i32
  }
  func.func @transform_8(%arg0: i32) -> (i32, i32, i32) {
    %c0_i32 = arith.constant 0 : i32
    %c0_i32_0 = arith.constant 0 : i32
    %c0_i32_1 = arith.constant 0 : i32
    return %arg0, %c0_i32, %c0_i32_0 : i32, i32, i32
  }
}

</mosaic_0001>

<llo_original>
// kernel: gat_forward.1
$region0: #{gat_forward.1}
  #allocation0 [shape = 'u32[]', space=smem, size = 0x4, offset = 0x4, fixed_abs, tag = 'smem constant byte address 0x4 - core index']
  #allocation1 [shape = 'u32[144,128]{1,0:T(1,128)}', space=vmem, size = 0x12000, scoped, tag = 'internal scratch']
  %s0 = inlined_call_operand.vmem [shape: f32[2,8,128], index: 0, kind: input, shape index: {}]
  %s1 = inlined_call_operand.vmem [shape: f32[2,8,96], index: 1, kind: input, shape index: {}]
  %s2 = inlined_call_operand.vmem [shape: bf16[2,32,128], index: 2, kind: input, shape index: {}]
  %s3 = inlined_call_operand.vmem [shape: f32[2,1,128], index: 3, kind: input, shape index: {}]
  %s4 = inlined_call_operand.vmem [shape: bf16[2,128,96], index: 4, kind: input, shape index: {}]
  %s5 = inlined_call_operand.vmem [shape: f32[2,1,96], index: 5, kind: input, shape index: {}]
  %s6 = inlined_call_operand.vmem [shape: bf16[2,32,8], index: 6, kind: input, shape index: {}]
  %s7 = inlined_call_operand.vmem [shape: f32[2,1,8], index: 7, kind: input, shape index: {}]
  %s8 = inlined_call_operand.vmem [shape: f32[2,8,128], index: 8, kind: output, shape index: {}]
  %s9 = sld [smem:[#allocation0]]
  $region65: #{gat_forward.1} parent=0
    _
  %s11 = ssub.s32 1, %s9
  %s12 = scalar_select 0, %s11, %s9
  loop: start=0, step=1, limit=4
  $region2: #{gat_forward.1} parent=0 // loop_pre_header
    _
  $region3: #{gat_forward.1} parent=0 // loop_header
    %s14 = sphi 0, %s18
    %p15 = scmp.ge.s32.totalorder %s14, 4
    %s24 = sphi 0, %s26
    %s27 = sphi 0, %s24
    %s28 = sphi 0, %s27
    %s44 = sphi 0, %s28
    %s50 = sphi 0, %s52
    %s53 = sphi 0, %s50
    %s54 = sphi 0, %s53
    %s70 = sphi 0, %s54
    %s74 = sphi 0, %s74
    %s76 = sphi 0, %s74
    %s77 = sphi 0, %s76
    %s91 = sphi 0, %s77
    %s95 = sphi 0, %s95
    %s97 = sphi 0, %s95
    %s98 = sphi 0, %s97
    %s112 = sphi 0, %s98
    %s116 = sphi 0, %s116
    %s118 = sphi 0, %s116
    %s119 = sphi 0, %s118
    %s133 = sphi 0, %s119
    %s137 = sphi 0, %s137
    %s139 = sphi 0, %s137
    %s140 = sphi 0, %s139
    %s154 = sphi 0, %s140
    %s158 = sphi 0, %s158
    %s160 = sphi 0, %s158
    %s161 = sphi 0, %s160
    %s175 = sphi 0, %s161
    %s179 = sphi 0, %s179
    %s181 = sphi 0, %s179
    %s182 = sphi 0, %s181
    %s196 = sphi 0, %s182
    %s202 = sphi 0, %s204
    %s205 = sphi 0, %s202
    %s206 = sphi 0, %s205
    %s222 = sphi 0, %s206
  $region4: #{gat_forward.1} parent=0 // loop_header_branch
    %17 = sbr.rel (%p15) target = $region8
  $region5: #{gat_forward.1} parent=0 // loop_body
    %s19 = ssub.s32 %s14, 1
    %s20 = ssub.s32 %s14, 2
    %s21 = sadd.s32 %s14, 1
    %s22 = ssub.s32 %s14, %s21
    %p23 = scmp.eq.s32.totalorder %s22, 0
    %s25 = sadd.s32 %s24, 1
    %s26 = scalar_select %p23, %s24, %s25
    %p29 = pneg %p23
    %p30 = scmp.eq.s32.totalorder %s14, 1
    %p31 = por %p29, %p30
    %p32 = scmp.ne.s32.totalorder %s24, %s27
    %p33 = scmp.eq.s32.totalorder %s14, 0
    %p34 = por %p32, %p33
    %p35 = scmp.ne.s32.totalorder %s24, %s27
    %p36 = scmp.eq.s32.totalorder %s19, 1
    %p37 = por %p35, %p36
    %p38 = scmp.ne.s32.totalorder %s27, %s28
    %p39 = scmp.eq.s32.totalorder %s19, 0
    %p40 = por %p38, %p39
    %p41 = scmp.ne.s32.totalorder %s27, %s28
    %p42 = scmp.eq.s32.totalorder %s20, 1
    %p43 = por %p41, %p42
    %p45 = scmp.ne.s32.totalorder %s28, %s44
    %p46 = scmp.eq.s32.totalorder %s20, 0
    %p47 = por %p45, %p46
    %s48 = ssub.s32 %s14, %s21
    %p49 = scmp.eq.s32.totalorder %s48, 0
    %s51 = sadd.s32 %s50, 1
    %s52 = scalar_select %p49, %s50, %s51
    %p55 = pneg %p49
    %p56 = scmp.eq.s32.totalorder %s14, 1
    %p57 = por %p55, %p56
    %p58 = scmp.ne.s32.totalorder %s50, %s53
    %p59 = scmp.eq.s32.totalorder %s14, 0
    %p60 = por %p58, %p59
    %p61 = scmp.ne.s32.totalorder %s50, %s53
    %p62 = scmp.eq.s32.totalorder %s19, 1
    %p63 = por %p61, %p62
    %p64 = scmp.ne.s32.totalorder %s53, %s54
    %p65 = scmp.eq.s32.totalorder %s19, 0
    %p66 = por %p64, %p65
    %p67 = scmp.ne.s32.totalorder %s53, %s54
    %p68 = scmp.eq.s32.totalorder %s20, 1
    %p69 = por %p67, %p68
    %p71 = scmp.ne.s32.totalorder %s54, %s70
    %p72 = scmp.eq.s32.totalorder %s20, 0
    %p73 = por %p71, %p72
    %s75 = sadd.s32 %s74, 1
    %p78 = scmp.eq.s32.totalorder %s14, 1
    %p79 = scmp.ne.s32.totalorder %s74, %s76
    %p80 = scmp.eq.s32.totalorder %s14, 0
    %p81 = por %p79, %p80
    %p82 = scmp.ne.s32.totalorder %s74, %s76
    %p83 = scmp.eq.s32.totalorder %s19, 1
    %p84 = por %p82, %p83
    %p85 = scmp.ne.s32.totalorder %s76, %s77
    %p86 = scmp.eq.s32.totalorder %s19, 0
    %p87 = por %p85, %p86
    %p88 = scmp.ne.s32.totalorder %s76, %s77
    %p89 = scmp.eq.s32.totalorder %s20, 1
    %p90 = por %p88, %p89
    %p92 = scmp.ne.s32.totalorder %s77, %s91
    %p93 = scmp.eq.s32.totalorder %s20, 0
    %p94 = por %p92, %p93
    %s96 = sadd.s32 %s95, 1
    %p99 = scmp.eq.s32.totalorder %s14, 1
    %p100 = scmp.ne.s32.totalorder %s95, %s97
    %p101 = scmp.eq.s32.totalorder %s14, 0
    %p102 = por %p100, %p101
    %p103 = scmp.ne.s32.totalorder %s95, %s97
    %p104 = scmp.eq.s32.totalorder %s19, 1
    %p105 = por %p103, %p104
    %p106 = scmp.ne.s32.totalorder %s97, %s98
    %p107 = scmp.eq.s32.totalorder %s19, 0
    %p108 = por %p106, %p107
    %p109 = scmp.ne.s32.totalorder %s97, %s98
    %p110 = scmp.eq.s32.totalorder %s20, 1
    %p111 = por %p109, %p110
    %p113 = scmp.ne.s32.totalorder %s98, %s112
    %p114 = scmp.eq.s32.totalorder %s20, 0
    %p115 = por %p113, %p114
    %s117 = sadd.s32 %s116, 1
    %p120 = scmp.eq.s32.totalorder %s14, 1
    %p121 = scmp.ne.s32.totalorder %s116, %s118
    %p122 = scmp.eq.s32.totalorder %s14, 0
    %p123 = por %p121, %p122
    %p124 = scmp.ne.s32.totalorder %s116, %s118
    %p125 = scmp.eq.s32.totalorder %s19, 1
    %p126 = por %p124, %p125
    %p127 = scmp.ne.s32.totalorder %s118, %s119
    %p128 = scmp.eq.s32.totalorder %s19, 0
    %p129 = por %p127, %p128
    %p130 = scmp.ne.s32.totalorder %s118, %s119
    %p131 = scmp.eq.s32.totalorder %s20, 1
    %p132 = por %p130, %p131
    %p134 = scmp.ne.s32.totalorder %s119, %s133
    %p135 = scmp.eq.s32.totalorder %s20, 0
    %p136 = por %p134, %p135
    %s138 = sadd.s32 %s137, 1
    %p141 = scmp.eq.s32.totalorder %s14, 1
    %p142 = scmp.ne.s32.totalorder %s137, %s139
    %p143 = scmp.eq.s32.totalorder %s14, 0
    %p144 = por %p142, %p143
    %p145 = scmp.ne.s32.totalorder %s137, %s139
    %p146 = scmp.eq.s32.totalorder %s19, 1
    %p147 = por %p145, %p146
    %p148 = scmp.ne.s32.totalorder %s139, %s140
    %p149 = scmp.eq.s32.totalorder %s19, 0
    %p150 = por %p148, %p149
    %p151 = scmp.ne.s32.totalorder %s139, %s140
    %p152 = scmp.eq.s32.totalorder %s20, 1
    %p153 = por %p151, %p152
    %p155 = scmp.ne.s32.totalorder %s140, %s154
    %p156 = scmp.eq.s32.totalorder %s20, 0
    %p157 = por %p155, %p156
    %s159 = sadd.s32 %s158, 1
    %p162 = scmp.eq.s32.totalorder %s14, 1
    %p163 = scmp.ne.s32.totalorder %s158, %s160
    %p164 = scmp.eq.s32.totalorder %s14, 0
    %p165 = por %p163, %p164
    %p166 = scmp.ne.s32.totalorder %s158, %s160
    %p167 = scmp.eq.s32.totalorder %s19, 1
    %p168 = por %p166, %p167
    %p169 = scmp.ne.s32.totalorder %s160, %s161
    %p170 = scmp.eq.s32.totalorder %s19, 0
    %p171 = por %p169, %p170
    %p172 = scmp.ne.s32.totalorder %s160, %s161
    %p173 = scmp.eq.s32.totalorder %s20, 1
    %p174 = por %p172, %p173
    %p176 = scmp.ne.s32.totalorder %s161, %s175
    %p177 = scmp.eq.s32.totalorder %s20, 0
    %p178 = por %p176, %p177
    %s180 = sadd.s32 %s179, 1
    %p183 = scmp.eq.s32.totalorder %s14, 1
    %p184 = scmp.ne.s32.totalorder %s179, %s181
    %p185 = scmp.eq.s32.totalorder %s14, 0
    %p186 = por %p184, %p185
    %p187 = scmp.ne.s32.totalorder %s179, %s181
    %p188 = scmp.eq.s32.totalorder %s19, 1
    %p189 = por %p187, %p188
    %p190 = scmp.ne.s32.totalorder %s181, %s182
    %p191 = scmp.eq.s32.totalorder %s19, 0
    %p192 = por %p190, %p191
    %p193 = scmp.ne.s32.totalorder %s181, %s182
    %p194 = scmp.eq.s32.totalorder %s20, 1
    %p195 = por %p193, %p194
    %p197 = scmp.ne.s32.totalorder %s182, %s196
    %p198 = scmp.eq.s32.totalorder %s20, 0
    %p199 = por %p197, %p198
    %s200 = ssub.s32 %s14, %s21
    %p201 = scmp.eq.s32.totalorder %s200, 0
    %s203 = sadd.s32 %s202, 1
    %s204 = scalar_select %p201, %s202, %s203
    %p207 = pneg %p201
    %p208 = scmp.eq.s32.totalorder %s14, 1
    %p209 = por %p207, %p208
    %p210 = scmp.ne.s32.totalorder %s202, %s205
    %p211 = scmp.eq.s32.totalorder %s14, 0
    %p212 = por %p210, %p211
    %p213 = scmp.ne.s32.totalorder %s202, %s205
    %p214 = scmp.eq.s32.totalorder %s19, 1
    %p215 = por %p213, %p214
    %p216 = scmp.ne.s32.totalorder %s205, %s206
    %p217 = scmp.eq.s32.totalorder %s19, 0
    %p218 = por %p216, %p217
    %p219 = scmp.ne.s32.totalorder %s205, %s206
    %p220 = scmp.eq.s32.totalorder %s20, 1
    %p221 = por %p219, %p220
    %p223 = scmp.ne.s32.totalorder %s206, %s222
    %p224 = scmp.eq.s32.totalorder %s20, 0
    %p225 = por %p223, %p224
    %p226 = scmp.le.s32.totalorder 1, %s14
    %p227 = scmp.lt.s32.totalorder %s14, 3
    %p228 = pnand %p226, %p227
    %p229 = pneg %p228
    // Predicated region
    $region9: #{gat_forward.1} parent=5 // pred_check
      _
    $region10: #{gat_forward.1} parent=5 // pred_check_branch
      %231 = sbr.rel (%p228) target = $region12
    $region11: #{gat_forward.1} parent=5 // pred_region
      %s232 = ssub.s32 %s14, 1
      // Predicated region
      $region13: #{gat_forward.1} parent=11 // pred_check
        %p233 = pneg %p87
      $region14: #{gat_forward.1} parent=11 // pred_check_branch
        %235 = sbr.rel (%p233) target = $region16
      $region15: #{gat_forward.1} parent=11 // pred_region
        _
      $region16: #{gat_forward.1} parent=11 // pred_fallthru
        _
      // Predicated region
      $region17: #{gat_forward.1} parent=11 // pred_check
        %p236 = pneg %p108
      $region18: #{gat_forward.1} parent=11 // pred_check_branch
        %238 = sbr.rel (%p236) target = $region20
      $region19: #{gat_forward.1} parent=11 // pred_region
        _
      $region20: #{gat_forward.1} parent=11 // pred_fallthru
        _
      // Predicated region
      $region21: #{gat_forward.1} parent=11 // pred_check
        %p239 = pneg %p129
      $region22: #{gat_forward.1} parent=11 // pred_check_branch
        %241 = sbr.rel (%p239) target = $region24
      $region23: #{gat_forward.1} parent=11 // pred_region
        _
      $region24: #{gat_forward.1} parent=11 // pred_fallthru
        _
      // Predicated region
      $region25: #{gat_forward.1} parent=11 // pred_check
        %p242 = pneg %p150
      $region26: #{gat_forward.1} parent=11 // pred_check_branch
        %244 = sbr.rel (%p242) target = $region28
      $region27: #{gat_forward.1} parent=11 // pred_region
        _
      $region28: #{gat_forward.1} parent=11 // pred_fallthru
        _
      // Predicated region
      $region29: #{gat_forward.1} parent=11 // pred_check
        %p245 = pneg %p171
      $region30: #{gat_forward.1} parent=11 // pred_check_branch
        %247 = sbr.rel (%p245) target = $region32
      $region31: #{gat_forward.1} parent=11 // pred_region
        _
      $region32: #{gat_forward.1} parent=11 // pred_fallthru
        _
      // Predicated region
      $region33: #{gat_forward.1} parent=11 // pred_check
        %p248 = pneg %p192
      $region34: #{gat_forward.1} parent=11 // pred_check_branch
        %250 = sbr.rel (%p248) target = $region36
      $region35: #{gat_forward.1} parent=11 // pred_region
        _
      $region36: #{gat_forward.1} parent=11 // pred_fallthru
        _
    $region12: #{gat_forward.1} parent=5 // pred_fallthru
      _
    %p251 = scmp.lt.s32.totalorder %s14, 2
    // Predicated region
    $region37: #{gat_forward.1} parent=5 // pred_check
      %p252 = pneg %p251
    $region38: #{gat_forward.1} parent=5 // pred_check_branch
      %254 = sbr.rel (%p252) target = $region40
    $region39: #{gat_forward.1} parent=5 // pred_region
      // Predicated region
      $region41: #{gat_forward.1} parent=39 // pred_check
        %p255 = pneg %p34
      $region42: #{gat_forward.1} parent=39 // pred_check_branch
        %257 = sbr.rel (%p255) target = $region44
      $region43: #{gat_forward.1} parent=39 // pred_region
        %p258 = scmp.lt.s32.totalorder %s14, 1
        %s259 = scalar_select %p258, %s14, 1
        %s260 = smul.addr %s259, 8
        %s261 = scalar_lea.vmem %s0, %s260
      $region44: #{gat_forward.1} parent=39 // pred_fallthru
        _
      // Predicated region
      $region45: #{gat_forward.1} parent=39 // pred_check
        %p262 = pneg %p60
      $region46: #{gat_forward.1} parent=39 // pred_check_branch
        %264 = sbr.rel (%p262) target = $region48
      $region47: #{gat_forward.1} parent=39 // pred_region
        %p265 = scmp.lt.s32.totalorder %s14, 1
        %s266 = scalar_select %p265, %s14, 1
        %s267 = smul.addr %s266, 8
        %s268 = scalar_lea.vmem %s1, %s267
      $region48: #{gat_forward.1} parent=39 // pred_fallthru
        _
    $region40: #{gat_forward.1} parent=5 // pred_fallthru
      _
    %p269 = scmp.le.s32.totalorder 1, %s14
    %p270 = scmp.lt.s32.totalorder %s14, 3
    %p271 = pnand %p269, %p270
    %p272 = pneg %p271
    // Predicated region
    $region49: #{gat_forward.1} parent=5 // pred_check
      _
    $region50: #{gat_forward.1} parent=5 // pred_check_branch
      %274 = sbr.rel (%p271) target = $region52
    $region51: #{gat_forward.1} parent=5 // pred_region
      %s275 = ssub.s32 %s14, 1
      %p276 = scmp.lt.s32.totalorder %s19, 1
      %s277 = scalar_select %p276, %s19, 1
      %s278 = smul.addr %s277, 8
      %s279 = scalar_lea.vmem %s0, %s278
      %p280 = pneg %p40
      %p281 = pneg %p37
      %p282 = scmp.lt.s32.totalorder %s19, 1
      %s283 = scalar_select %p282, %s19, 1
      %s284 = smul.addr %s283, 8
      %s285 = scalar_lea.vmem %s1, %s284
      %p286 = pneg %p66
      %p287 = pneg %p63
      %p288 = pneg %p87
      %p289 = pneg %p84
      %p290 = pneg %p108
      %p291 = pneg %p105
      %p292 = pneg %p129
      %p293 = pneg %p126
      %p294 = pneg %p150
      %p295 = pneg %p147
      %p296 = pneg %p171
      %p297 = pneg %p168
      %p298 = pneg %p192
      %p299 = pneg %p189
      %p300 = pneg %p218
      %p301 = pneg %p215
      %p302 = scmp.lt.s32.totalorder %s19, 1
      %s303 = scalar_select %p302, %s19, 1
      %s304 = smul.addr %s303, 8
      %s305 = scalar_lea.vmem %s8, %s304
      %p306 = scmp.lt.s32.totalorder %s19, 1
      %s307 = scalar_select %p306, %s19, 1
      %s308 = smul.addr %s307, 8
      %s309 = scalar_lea.vmem %s0, %s308
      %p310 = scmp.lt.s32.totalorder %s19, 1
      %s311 = scalar_select %p310, %s19, 1
      %s312 = smul.addr %s311, 8
      %s313 = scalar_lea.vmem %s1, %s312
      %p314 = scmp.lt.s32.totalorder %s19, 1
      %s315 = scalar_select %p314, %s19, 1
      %s316 = smul.addr %s315, 8
      %s317 = scalar_lea.vmem %s8, %s316
      %v319 = vld [vmem:[%s309] sm:$0xff]
      %v320 = vld [vmem:[%s313] sm:$0xff]
      %322 = vrot.lane.b32.xlu0 %v319, 96
      %v323 = vpop.permute.xlu0 %322
      %325 = vrot.lane.b32.xlu0 %v319, 64
      %v326 = vpop.permute.xlu0 %325
      %328 = vrot.lane.b32.xlu0 %v319, 32
      %v329 = vpop.permute.xlu0 %328
      %v331 = vpack.c.bf16 %v323, %v319
      %v332 = vpack.c.bf16 %v329, %v326
      %v333 = vpack.c.bf16 %v319, %v319
      %v334 = vld [vmem:[%s2] sm:$0xf]
      %v335 = vld [vmem:[%s2 + $0x4] sm:$0xf]
      %v336 = vld [vmem:[%s2 + $0x8] sm:$0xf]
      %v337 = vld [vmem:[%s2 + $0xc] sm:$0xf]
      %v338 = vld [vmem:[%s3] sm:$0x1]
      %v340 = vlaneseq
      %v341 = vshrl.u32 %v340, 7
      %v342 = vsub.s32 0, %v341
      %v343 = vrot.slane %v338, %v342
      %v349 = vunpack.c.l.b16 %v334
      %v350 = vunpack.c.l.b16 %v335
      %v351 = vunpack.c.l.b16 %v336
      %v352 = vunpack.c.l.b16 %v337
      %v353 = vpack.c.b16 %v350, %v349
      %v354 = vpack.c.b16 %v352, %v351
      %vm357 = vcmask 261120
      %v359 = vsel %vm357, %v331, 0
      %v362 = vsel %vm357, %v332, 0
      %364 = vmatprep.subr.bf16.mxu0 0
      %365 = vmatpush1.bf16.msra.mxu0 0
      %366 = vmatprep.subr.bf16.mxu0 0
      %367 = vmatpush1.bf16.msra.mxu0 0
      %368 = vmatprep.subr.bf16.mxu0 0
      %369 = vmatpush1.bf16.msra.mxu0 0
      %370 = vmatprep.subr.bf16.mxu0 0
      %371 = vmatpush1.bf16.msra.mxu0 0
      %372 = vmatprep.subr.bf16.mxu0 0
      %373 = vmatpush1.bf16.msra.mxu0 0
      %374 = vmatprep.subr.bf16.mxu0 0
      %375 = vmatpush1.bf16.msra.mxu0 0
      %376 = vmatprep.subr.bf16.mxu0 0
      %377 = vmatpush1.bf16.msra.mxu0 %v354
      %378 = vmatprep.subr.bf16.mxu0 0
      %379 = vmatpush1.bf16.msra.mxu0 %v353
      %380 = vmatprep.subr.bf16.mxu0 0
      %381 = vmatpush2.bf16.msra.mxu0 0
      %382 = vmatprep.subr.bf16.mxu0 0
      %383 = vmatpush2.bf16.msra.mxu0 0
      %384 = vmatprep.subr.bf16.mxu0 0
      %385 = vmatpush2.bf16.msra.mxu0 0
      %386 = vmatprep.subr.bf16.mxu0 0
      %387 = vmatpush2.bf16.msra.mxu0 0
      %388 = vmatprep.subr.bf16.mxu0 0
      %389 = vmatpush2.bf16.msra.mxu0 0
      %390 = vmatprep.subr.bf16.mxu0 0
      %391 = vmatpush2.bf16.msra.mxu0 0
      %392 = vmatprep.subr.bf16.mxu0 0
      %393 = vmatpush2.bf16.msra.mxu0 0
      %394 = vmatprep.subr.bf16.mxu0 0
      %395 = vmatpush2.bf16.msra.mxu0 0
      %396 = vmatprep.mubr.bf16.mxu0 0
      %397 = vmatmul.mubr.bf16.gmra.mxu0 %v359
      %v398 = vpop.f32.mrf.mxu0
      %v399 = vadd.f32 %v343, %v398
      %v400 = vpop.f32.mrf.mxu0
      %v401 = vpop.f32.mrf.mxu0
      %v402 = vadd.f32 %v343, %v401
      %v403 = vpop.f32.mrf.mxu0
      %404 = vmatprep.mubr.bf16.mxu0 0
      %405 = vmatmul.mubr.bf16.gmra.mxu0 %v362
      %v406 = vpop.f32.mrf.mxu0
      %v407 = vadd.f32 %v343, %v406
      %v408 = vpop.f32.mrf.mxu0
      %v409 = vpop.f32.mrf.mxu0
      %v410 = vadd.f32 %v343, %v409
      %v411 = vpop.f32.mrf.mxu0
      %412 = vdwg.mxu0
      %v413 = vld [vmem:[%s4] sm:$0xf]
      %v414 = vld [vmem:[%s4 + $0x4] sm:$0xf]
      %v415 = vld [vmem:[%s4 + $0x8] sm:$0xf]
      %v416 = vld [vmem:[%s4 + $0xc] sm:$0xf]
      %v417 = vld [vmem:[%s4 + $0x10] sm:$0xf]
      %v418 = vld [vmem:[%s4 + $0x14] sm:$0xf]
      %v419 = vld [vmem:[%s4 + $0x18] sm:$0xf]
      %v420 = vld [vmem:[%s4 + $0x1c] sm:$0xf]
      %v421 = vld [vmem:[%s4 + $0x20] sm:$0xf]
      %v422 = vld [vmem:[%s4 + $0x24] sm:$0xf]
      %v423 = vld [vmem:[%s4 + $0x28] sm:$0xf]
      %v424 = vld [vmem:[%s4 + $0x2c] sm:$0xf]
      %v425 = vld [vmem:[%s4 + $0x30] sm:$0xf]
      %v426 = vld [vmem:[%s4 + $0x34] sm:$0xf]
      %v427 = vld [vmem:[%s4 + $0x38] sm:$0xf]
      %v428 = vld [vmem:[%s4 + $0x3c] sm:$0xf]
      %v429 = vld [vmem:[%s5] sm:$0x1]
      %v431 = vlaneseq
      %v432 = vshrl.u32 %v431, 7
      %v433 = vsub.s32 0, %v432
      %v434 = vrot.slane %v429, %v433
      %v452 = vunpack.c.l.b16 %v413
      %v453 = vunpack.c.l.b16 %v414
      %v454 = vunpack.c.l.b16 %v415
      %v455 = vunpack.c.l.b16 %v416
      %v456 = vunpack.c.l.b16 %v417
      %v457 = vunpack.c.l.b16 %v418
      %v458 = vunpack.c.l.b16 %v419
      %v459 = vunpack.c.l.b16 %v420
      %v460 = vunpack.c.l.b16 %v421
      %v461 = vunpack.c.l.b16 %v422
      %v462 = vunpack.c.l.b16 %v423
      %v463 = vunpack.c.l.b16 %v424
      %v464 = vunpack.c.l.b16 %v425
      %v465 = vunpack.c.l.b16 %v426
      %v466 = vunpack.c.l.b16 %v427
      %v467 = vunpack.c.l.b16 %v428
      %v468 = vpack.c.b16 %v453, %v452
      %v469 = vpack.c.b16 %v455, %v454
      %v470 = vpack.c.b16 %v457, %v456
      %v471 = vpack.c.b16 %v459, %v458
      %v472 = vpack.c.b16 %v461, %v460
      %v473 = vpack.c.b16 %v463, %v462
      %v474 = vpack.c.b16 %v465, %v464
      %v475 = vpack.c.b16 %v467, %v466
      %484 = vmatprep.subr.bf16.mxu0 0
      %485 = vmatpush1.bf16.msra.mxu0 %v475
      %486 = vmatprep.subr.bf16.mxu0 0
      %487 = vmatpush1.bf16.msra.mxu0 %v474
      %488 = vmatprep.subr.bf16.mxu0 0
      %489 = vmatpush1.bf16.msra.mxu0 %v473
      %490 = vmatprep.subr.bf16.mxu0 0
      %491 = vmatpush1.bf16.msra.mxu0 %v472
      %492 = vmatprep.subr.bf16.mxu0 0
      %493 = vmatpush1.bf16.msra.mxu0 %v471
      %494 = vmatprep.subr.bf16.mxu0 0
      %495 = vmatpush1.bf16.msra.mxu0 %v470
      %496 = vmatprep.subr.bf16.mxu0 0
      %497 = vmatpush1.bf16.msra.mxu0 %v469
      %498 = vmatprep.subr.bf16.mxu0 0
      %499 = vmatpush1.bf16.msra.mxu0 %v468
      %500 = vmatprep.subr.bf16.mxu0 0
      %501 = vmatpush2.bf16.msra.mxu0 0
      %502 = vmatprep.subr.bf16.mxu0 0
      %503 = vmatpush2.bf16.msra.mxu0 0
      %504 = vmatprep.subr.bf16.mxu0 0
      %505 = vmatpush2.bf16.msra.mxu0 0
      %506 = vmatprep.subr.bf16.mxu0 0
      %507 = vmatpush2.bf16.msra.mxu0 0
      %508 = vmatprep.subr.bf16.mxu0 0
      %509 = vmatpush2.bf16.msra.mxu0 0
      %510 = vmatprep.subr.bf16.mxu0 0
      %511 = vmatpush2.bf16.msra.mxu0 0
      %512 = vmatprep.subr.bf16.mxu0 0
      %513 = vmatpush2.bf16.msra.mxu0 0
      %514 = vmatprep.subr.bf16.mxu0 0
      %515 = vmatpush2.bf16.msra.mxu0 0
      %516 = vmatprep.mubr.bf16.mxu0 0
      %517 = vmatmul.mubr.bf16.gmra.mxu0 %v333
      %v518 = vpop.f32.mrf.mxu0
      %v519 = vadd.f32 %v434, %v518
      %v520 = vpop.f32.mrf.mxu0
      %v521 = vpop.f32.mrf.mxu0
      %v522 = vpop.f32.mrf.mxu0
      %523 = vdwg.mxu0
      %v524 = vld [vmem:[%s6] sm:$0xf]
      %v525 = vld [vmem:[%s6 + $0x4] sm:$0xf]
      %v526 = vld [vmem:[%s6 + $0x8] sm:$0xf]
      %v527 = vld [vmem:[%s6 + $0xc] sm:$0xf]
      %v528 = vld [vmem:[%s7] sm:$0x1]
      %v530 = vlaneseq
      %v531 = vshrl.u32 %v530, 7
      %v532 = vsub.s32 0, %v531
      %v533 = vrot.slane %v528, %v532
      %v539 = vunpack.c.l.b16 %v524
      %v540 = vunpack.c.l.b16 %v525
      %v541 = vunpack.c.l.b16 %v526
      %v542 = vunpack.c.l.b16 %v527
      %v543 = vpack.c.b16 %v540, %v539
      %v544 = vpack.c.b16 %v542, %v541
      %547 = vmatprep.subr.bf16.mxu0 0
      %548 = vmatpush1.bf16.msra.mxu0 0
      %549 = vmatprep.subr.bf16.mxu0 0
      %550 = vmatpush1.bf16.msra.mxu0 0
      %551 = vmatprep.subr.bf16.mxu0 0
      %552 = vmatpush1.bf16.msra.mxu0 0
      %553 = vmatprep.subr.bf16.mxu0 0
      %554 = vmatpush1.bf16.msra.mxu0 0
      %555 = vmatprep.subr.bf16.mxu0 0
      %556 = vmatpush1.bf16.msra.mxu0 0
      %557 = vmatprep.subr.bf16.mxu0 0
      %558 = vmatpush1.bf16.msra.mxu0 0
      %559 = vmatprep.subr.bf16.mxu0 0
      %560 = vmatpush1.bf16.msra.mxu0 %v544
      %561 = vmatprep.subr.bf16.mxu0 0
      %562 = vmatpush1.bf16.msra.mxu0 %v543
      %563 = vmatprep.subr.bf16.mxu0 0
      %564 = vmatpush2.bf16.msra.mxu0 0
      %565 = vmatprep.subr.bf16.mxu0 0
      %566 = vmatpush2.bf16.msra.mxu0 0
      %567 = vmatprep.subr.bf16.mxu0 0
      %568 = vmatpush2.bf16.msra.mxu0 0
      %569 = vmatprep.subr.bf16.mxu0 0
      %570 = vmatpush2.bf16.msra.mxu0 0
      %571 = vmatprep.subr.bf16.mxu0 0
      %572 = vmatpush2.bf16.msra.mxu0 0
      %573 = vmatprep.subr.bf16.mxu0 0
      %574 = vmatpush2.bf16.msra.mxu0 0
      %575 = vmatprep.subr.bf16.mxu0 0
      %576 = vmatpush2.bf16.msra.mxu0 0
      %577 = vmatprep.subr.bf16.mxu0 0
      %578 = vmatpush2.bf16.msra.mxu0 0
      %579 = vmatprep.mubr.bf16.mxu0 0
      %580 = vmatmul.mubr.bf16.gmra.mxu0 %v359
      %v581 = vpop.f32.mrf.mxu0
      %v582 = vadd.f32 %v533, %v581
      %v583 = vpop.f32.mrf.mxu0
      %v584 = vpop.f32.mrf.mxu0
      %v585 = vadd.f32 %v533, %v584
      %v586 = vpop.f32.mrf.mxu0
      %587 = vmatprep.mubr.bf16.mxu0 0
      %588 = vmatmul.mubr.bf16.gmra.mxu0 %v362
      %v589 = vpop.f32.mrf.mxu0
      %v590 = vadd.f32 %v533, %v589
      %v591 = vpop.f32.mrf.mxu0
      %v592 = vpop.f32.mrf.mxu0
      %v593 = vadd.f32 %v533, %v592
      %v594 = vpop.f32.mrf.mxu0
      %595 = vdwg.mxu0
      %596 = vxpose.xlu0.b32.start [1/16] %v582, 128
      %597 = vxpose.xlu0.b32.cont [2/16] %v585, 128
      %598 = vxpose.xlu0.b32.cont [3/16] %v590, 128
      %599 = vxpose.xlu0.b32.cont [4/16] %v593, 128
      %600 = vxpose.xlu0.b32.cont [5/16] 0.0, 128
      %601 = vxpose.xlu0.b32.cont [6/16] 0.0, 128
      %602 = vxpose.xlu0.b32.cont [7/16] 0.0, 128
      %603 = vxpose.xlu0.b32.cont [8/16] 0.0, 128
      %604 = vxpose.xlu0.b32.cont [9/16] 0.0, 128
      %605 = vxpose.xlu0.b32.cont [10/16] 0.0, 128
      %606 = vxpose.xlu0.b32.cont [11/16] 0.0, 128
      %607 = vxpose.xlu0.b32.cont [12/16] 0.0, 128
      %608 = vxpose.xlu0.b32.cont [13/16] 0.0, 128
      %609 = vxpose.xlu0.b32.cont [14/16] 0.0, 128
      %610 = vxpose.xlu0.b32.cont [15/16] 0.0, 128
      %611 = vxpose.xlu0.b32.end [16/16] 0.0, 128
      %v612 = vpop.trf.xlu0
      %v613 = vpop.trf.xlu0
      %v614 = vpop.trf.xlu0
      %v615 = vpop.trf.xlu0
      %v616 = vpop.trf.xlu0
      %v617 = vpop.trf.xlu0
      %v618 = vpop.trf.xlu0
      %v619 = vpop.trf.xlu0
      %v620 = vpop.trf.xlu0
      %v621 = vpop.trf.xlu0
      %v622 = vpop.trf.xlu0
      %v623 = vpop.trf.xlu0
      %v624 = vpop.trf.xlu0
      %v625 = vpop.trf.xlu0
      %v626 = vpop.trf.xlu0
      %v627 = vpop.trf.xlu0
      %v629 = vrot.slane %v612, 1
      %630 = vrot.lane.b32.xlu0 %v629, 32
      %v631 = vpop.permute.xlu0 %630
      %v633 = vrot.slane %v612, 2
      %634 = vrot.lane.b32.xlu0 %v633, 64
      %v635 = vpop.permute.xlu0 %634
      %v637 = vsel %vm357, %v612, %v631
      %vm638 = vcmask 523264
      %v639 = vsel %vm638, %v637, %v635
      %v640 = vlaneseq
      %v641 = vshrl.u32 %v640, 7
      %v642 = vsub.s32 0, %v641
      %v643 = vrot.slane %v639, %v642
      %v644 = vadd.f32 %v643, %v519
      %vm645 = vcmp.gt.f32.partialorder %v644, 0.0
      %v646 = vmul.f32 %v644, 0.2
      %v647 = vsel %vm645, %v644, %v646
      %v648 = vadd.f32 %v647, %v320
      %vm649 = vcmask 785408
      %v650 = vsel %vm649, %v648, -inf
      %v651 = vrot.slane %v650, 4
      %v652 = vmax.f32 %v650, %v651
      %v653 = vrot.slane %v652, 2
      %v654 = vmax.f32 %v652, %v653
      %v655 = vrot.slane %v654, 1
      %v656 = vmax.f32 %v654, %v655
      %v657 = vsub.f32 %v648, %v656
      %v658 = vmul.f32 %v657, 1.442695
      %v659 = vpow.pop %v658
      %v660 = vsel %vm649, %v659, 0.0
      %v661 = vrot.slane %v660, 4
      %v662 = vadd.f32 %v660, %v661
      %v663 = vrot.slane %v662, 2
      %v664 = vadd.f32 %v662, %v663
      %v665 = vrot.slane %v664, 1
      %v666 = vadd.f32 %v664, %v665
      %v667 = vrcp.pop %v666
      %v668 = vmul.f32 %v659, %v667
      %669 = vxpose.xlu0.b32.start [1/16] %v668, 128
      %670 = vxpose.xlu0.b32.cont [2/16] 0.0, 128
      %671 = vxpose.xlu0.b32.cont [3/16] 0.0, 128
      %672 = vxpose.xlu0.b32.cont [4/16] 0.0, 128
      %673 = vxpose.xlu0.b32.cont [5/16] 0.0, 128
      %674 = vxpose.xlu0.b32.cont [6/16] 0.0, 128
      %675 = vxpose.xlu0.b32.cont [7/16] 0.0, 128
      %676 = vxpose.xlu0.b32.cont [8/16] 0.0, 128
      %677 = vxpose.xlu0.b32.cont [9/16] 0.0, 128
      %678 = vxpose.xlu0.b32.cont [10/16] 0.0, 128
      %679 = vxpose.xlu0.b32.cont [11/16] 0.0, 128
      %680 = vxpose.xlu0.b32.cont [12/16] 0.0, 128
      %681 = vxpose.xlu0.b32.cont [13/16] 0.0, 128
      %682 = vxpose.xlu0.b32.cont [14/16] 0.0, 128
      %683 = vxpose.xlu0.b32.cont [15/16] 0.0, 128
      %684 = vxpose.xlu0.b32.end [16/16] 0.0, 128
      %v685 = vpop.trf.xlu0
      %v686 = vpop.trf.xlu0
      %v687 = vpop.trf.xlu0
      %v688 = vpop.trf.xlu0
      %v689 = vpop.trf.xlu0
      %v690 = vpop.trf.xlu0
      %v691 = vpop.trf.xlu0
      %v692 = vpop.trf.xlu0
      %v693 = vpop.trf.xlu0
      %v694 = vpop.trf.xlu0
      %v695 = vpop.trf.xlu0
      %v696 = vpop.trf.xlu0
      %v697 = vpop.trf.xlu0
      %v698 = vpop.trf.xlu0
      %v699 = vpop.trf.xlu0
      %v700 = vpop.trf.xlu0
      %702 = vrot.lane.b32.xlu0 %v689, 8
      %v703 = vpop.permute.xlu0 %702
      %706 = vrot.lane.b32.xlu0 %v693, 16
      %v707 = vpop.permute.xlu0 %706
      %vm709 = vcmask 64512
      %v710 = vsel %vm709, %v685, %v703
      %vm711 = vcmask 130048
      %v712 = vsel %vm711, %v710, %v707
      %714 = vrot.lane.b32.xlu0 %v399, 96
      %v715 = vpop.permute.xlu0 %714
      %717 = vrot.lane.b32.xlu0 %v399, 64
      %v718 = vpop.permute.xlu0 %717
      %v720 = vpack.c.bf16 %v712, %v712
      %v721 = vpack.c.bf16 %v715, %v399
      %v722 = vpack.c.bf16 %v718, %v718
      %vm723 = vcmask 195584
      %v725 = vsel %vm723, %v720, 0
      %vm727 = vcmask 1043456
      %v729 = vsel %vm727, %v722, 0
      %731 = vmatprep.subr.bf16.mxu0 0
      %732 = vmatpush1.bf16.msra.mxu0 0
      %733 = vmatprep.subr.bf16.mxu0 0
      %734 = vmatpush1.bf16.msra.mxu0 0
      %735 = vmatprep.subr.bf16.mxu0 0
      %736 = vmatpush1.bf16.msra.mxu0 0
      %737 = vmatprep.subr.bf16.mxu0 0
      %738 = vmatpush1.bf16.msra.mxu0 0
      %739 = vmatprep.subr.bf16.mxu0 0
      %740 = vmatpush1.bf16.msra.mxu0 0
      %741 = vmatprep.subr.bf16.mxu0 0
      %742 = vmatpush1.bf16.msra.mxu0 0
      %743 = vmatprep.subr.bf16.mxu0 0
      %744 = vmatpush1.bf16.msra.mxu0 %v729
      %745 = vmatprep.subr.bf16.mxu0 0
      %746 = vmatpush1.bf16.msra.mxu0 %v721
      %747 = vmatprep.subr.bf16.mxu0 0
      %748 = vmatpush2.bf16.msra.mxu0 0
      %749 = vmatprep.subr.bf16.mxu0 0
      %750 = vmatpush2.bf16.msra.mxu0 0
      %751 = vmatprep.subr.bf16.mxu0 0
      %752 = vmatpush2.bf16.msra.mxu0 0
      %753 = vmatprep.subr.bf16.mxu0 0
      %754 = vmatpush2.bf16.msra.mxu0 0
      %755 = vmatprep.subr.bf16.mxu0 0
      %756 = vmatpush2.bf16.msra.mxu0 0
      %757 = vmatprep.subr.bf16.mxu0 0
      %758 = vmatpush2.bf16.msra.mxu0 0
      %759 = vmatprep.subr.bf16.mxu0 0
      %760 = vmatpush2.bf16.msra.mxu0 0
      %761 = vmatprep.subr.bf16.mxu0 0
      %762 = vmatpush2.bf16.msra.mxu0 0
      %763 = vmatprep.mubr.bf16.mxu0 0
      %764 = vmatmul.mubr.bf16.gmra.mxu0 %v725
      %v765 = vpop.f32.mrf.mxu0
      %v766 = vadd.f32 0.0, %v765
      %v767 = vpop.f32.mrf.mxu0
      %v768 = vpop.f32.mrf.mxu0
      %v769 = vpop.f32.mrf.mxu0
      %770 = vdwg.mxu0
      %772 = vrot.lane.b32.xlu0 %v690, 8
      %v773 = vpop.permute.xlu0 %772
      %776 = vrot.lane.b32.xlu0 %v694, 16
      %v777 = vpop.permute.xlu0 %776
      %v779 = vsel %vm709, %v686, %v773
      %v780 = vsel %vm711, %v779, %v777
      %782 = vrot.lane.b32.xlu0 %v402, 96
      %v783 = vpop.permute.xlu0 %782
      %785 = vrot.lane.b32.xlu0 %v402, 64
      %v786 = vpop.permute.xlu0 %785
      %v788 = vpack.c.bf16 %v780, %v780
      %v789 = vpack.c.bf16 %v783, %v402
      %v790 = vpack.c.bf16 %v786, %v786
      %v792 = vsel %vm723, %v788, 0
      %v795 = vsel %vm727, %v790, 0
      %797 = vmatprep.subr.bf16.mxu0 0
      %798 = vmatpush1.bf16.msra.mxu0 0
      %799 = vmatprep.subr.bf16.mxu0 0
      %800 = vmatpush1.bf16.msra.mxu0 0
      %801 = vmatprep.subr.bf16.mxu0 0
      %802 = vmatpush1.bf16.msra.mxu0 0
      %803 = vmatprep.subr.bf16.mxu0 0
      %804 = vmatpush1.bf16.msra.mxu0 0
      %805 = vmatprep.subr.bf16.mxu0 0
      %806 = vmatpush1.bf16.msra.mxu0 0
      %807 = vmatprep.subr.bf16.mxu0 0
      %808 = vmatpush1.bf16.msra.mxu0 0
      %809 = vmatprep.subr.bf16.mxu0 0
      %810 = vmatpush1.bf16.msra.mxu0 %v795
      %811 = vmatprep.subr.bf16.mxu0 0
      %812 = vmatpush1.bf16.msra.mxu0 %v789
      %813 = vmatprep.subr.bf16.mxu0 0
      %814 = vmatpush2.bf16.msra.mxu0 0
      %815 = vmatprep.subr.bf16.mxu0 0
      %816 = vmatpush2.bf16.msra.mxu0 0
      %817 = vmatprep.subr.bf16.mxu0 0
      %818 = vmatpush2.bf16.msra.mxu0 0
      %819 = vmatprep.subr.bf16.mxu0 0
      %820 = vmatpush2.bf16.msra.mxu0 0
      %821 = vmatprep.subr.bf16.mxu0 0
      %822 = vmatpush2.bf16.msra.mxu0 0
      %823 = vmatprep.subr.bf16.mxu0 0
      %824 = vmatpush2.bf16.msra.mxu0 0
      %825 = vmatprep.subr.bf16.mxu0 0
      %826 = vmatpush2.bf16.msra.mxu0 0
      %827 = vmatprep.subr.bf16.mxu0 0
      %828 = vmatpush2.bf16.msra.mxu0 0
      %829 = vmatprep.mubr.bf16.mxu0 0
      %830 = vmatmul.mubr.bf16.gmra.mxu0 %v792
      %v831 = vpop.f32.mrf.mxu0
      %v832 = vadd.f32 0.0, %v831
      %v833 = vpop.f32.mrf.mxu0
      %v834 = vpop.f32.mrf.mxu0
      %v835 = vpop.f32.mrf.mxu0
      %836 = vdwg.mxu0
      %838 = vrot.lane.b32.xlu0 %v691, 8
      %v839 = vpop.permute.xlu0 %838
      %842 = vrot.lane.b32.xlu0 %v695, 16
      %v843 = vpop.permute.xlu0 %842
      %v845 = vsel %vm709, %v687, %v839
      %v846 = vsel %vm711, %v845, %v843
      %848 = vrot.lane.b32.xlu0 %v407, 96
      %v849 = vpop.permute.xlu0 %848
      %851 = vrot.lane.b32.xlu0 %v407, 64
      %v852 = vpop.permute.xlu0 %851
      %v854 = vpack.c.bf16 %v846, %v846
      %v855 = vpack.c.bf16 %v849, %v407
      %v856 = vpack.c.bf16 %v852, %v852
      %v858 = vsel %vm723, %v854, 0
      %v861 = vsel %vm727, %v856, 0
      %863 = vmatprep.subr.bf16.mxu0 0
      %864 = vmatpush1.bf16.msra.mxu0 0
      %865 = vmatprep.subr.bf16.mxu0 0
      %866 = vmatpush1.bf16.msra.mxu0 0
      %867 = vmatprep.subr.bf16.mxu0 0
      %868 = vmatpush1.bf16.msra.mxu0 0
      %869 = vmatprep.subr.bf16.mxu0 0
      %870 = vmatpush1.bf16.msra.mxu0 0
      %871 = vmatprep.subr.bf16.mxu0 0
      %872 = vmatpush1.bf16.msra.mxu0 0
      %873 = vmatprep.subr.bf16.mxu0 0
      %874 = vmatpush1.bf16.msra.mxu0 0
      %875 = vmatprep.subr.bf16.mxu0 0
      %876 = vmatpush1.bf16.msra.mxu0 %v861
      %877 = vmatprep.subr.bf16.mxu0 0
      %878 = vmatpush1.bf16.msra.mxu0 %v855
      %879 = vmatprep.subr.bf16.mxu0 0
      %880 = vmatpush2.bf16.msra.mxu0 0
      %881 = vmatprep.subr.bf16.mxu0 0
      %882 = vmatpush2.bf16.msra.mxu0 0
      %883 = vmatprep.subr.bf16.mxu0 0
      %884 = vmatpush2.bf16.msra.mxu0 0
      %885 = vmatprep.subr.bf16.mxu0 0
      %886 = vmatpush2.bf16.msra.mxu0 0
      %887 = vmatprep.subr.bf16.mxu0 0
      %888 = vmatpush2.bf16.msra.mxu0 0
      %889 = vmatprep.subr.bf16.mxu0 0
      %890 = vmatpush2.bf16.msra.mxu0 0
      %891 = vmatprep.subr.bf16.mxu0 0
      %892 = vmatpush2.bf16.msra.mxu0 0
      %893 = vmatprep.subr.bf16.mxu0 0
      %894 = vmatpush2.bf16.msra.mxu0 0
      %895 = vmatprep.mubr.bf16.mxu0 0
      %896 = vmatmul.mubr.bf16.gmra.mxu0 %v858
      %v897 = vpop.f32.mrf.mxu0
      %v898 = vadd.f32 0.0, %v897
      %v899 = vpop.f32.mrf.mxu0
      %v900 = vpop.f32.mrf.mxu0
      %v901 = vpop.f32.mrf.mxu0
      %902 = vdwg.mxu0
      %904 = vrot.lane.b32.xlu0 %v692, 8
      %v905 = vpop.permute.xlu0 %904
      %908 = vrot.lane.b32.xlu0 %v696, 16
      %v909 = vpop.permute.xlu0 %908
      %v911 = vsel %vm709, %v688, %v905
      %v912 = vsel %vm711, %v911, %v909
      %914 = vrot.lane.b32.xlu0 %v410, 96
      %v915 = vpop.permute.xlu0 %914
      %917 = vrot.lane.b32.xlu0 %v410, 64
      %v918 = vpop.permute.xlu0 %917
      %v920 = vpack.c.bf16 %v912, %v912
      %v921 = vpack.c.bf16 %v915, %v410
      %v922 = vpack.c.bf16 %v918, %v918
      %v924 = vsel %vm723, %v920, 0
      %v927 = vsel %vm727, %v922, 0
      %929 = vmatprep.subr.bf16.mxu0 0
      %930 = vmatpush1.bf16.msra.mxu0 0
      %931 = vmatprep.subr.bf16.mxu0 0
      %932 = vmatpush1.bf16.msra.mxu0 0
      %933 = vmatprep.subr.bf16.mxu0 0
      %934 = vmatpush1.bf16.msra.mxu0 0
      %935 = vmatprep.subr.bf16.mxu0 0
      %936 = vmatpush1.bf16.msra.mxu0 0
      %937 = vmatprep.subr.bf16.mxu0 0
      %938 = vmatpush1.bf16.msra.mxu0 0
      %939 = vmatprep.subr.bf16.mxu0 0
      %940 = vmatpush1.bf16.msra.mxu0 0
      %941 = vmatprep.subr.bf16.mxu0 0
      %942 = vmatpush1.bf16.msra.mxu0 %v927
      %943 = vmatprep.subr.bf16.mxu0 0
      %944 = vmatpush1.bf16.msra.mxu0 %v921
      %945 = vmatprep.subr.bf16.mxu0 0
      %946 = vmatpush2.bf16.msra.mxu0 0
      %947 = vmatprep.subr.bf16.mxu0 0
      %948 = vmatpush2.bf16.msra.mxu0 0
      %949 = vmatprep.subr.bf16.mxu0 0
      %950 = vmatpush2.bf16.msra.mxu0 0
      %951 = vmatprep.subr.bf16.mxu0 0
      %952 = vmatpush2.bf16.msra.mxu0 0
      %953 = vmatprep.subr.bf16.mxu0 0
      %954 = vmatpush2.bf16.msra.mxu0 0
      %955 = vmatprep.subr.bf16.mxu0 0
      %956 = vmatpush2.bf16.msra.mxu0 0
      %957 = vmatprep.subr.bf16.mxu0 0
      %958 = vmatpush2.bf16.msra.mxu0 0
      %959 = vmatprep.subr.bf16.mxu0 0
      %960 = vmatpush2.bf16.msra.mxu0 0
      %961 = vmatprep.mubr.bf16.mxu0 0
      %962 = vmatmul.mubr.bf16.gmra.mxu0 %v924
      %v963 = vpop.f32.mrf.mxu0
      %v964 = vadd.f32 0.0, %v963
      %v965 = vpop.f32.mrf.mxu0
      %v966 = vpop.f32.mrf.mxu0
      %v967 = vpop.f32.mrf.mxu0
      %968 = vdwg.mxu0
      %v969 = vmax.f32 %v766, 0.0
      %v970 = vmax.f32 %v832, 0.0
      %v971 = vmax.f32 %v898, 0.0
      %v972 = vmax.f32 %v964, 0.0
      %v973 = vxor.u32 %v399, 2147483648
      %v974 = vxor.u32 %v402, 2147483648
      %v975 = vxor.u32 %v407, 2147483648
      %v976 = vxor.u32 %v410, 2147483648
      %v977 = vmul.f32 %v973, 1.442695
      %v978 = vpow.pop %v977
      %v979 = vmul.f32 %v974, 1.442695
      %v980 = vpow.pop %v979
      %v981 = vmul.f32 %v975, 1.442695
      %v982 = vpow.pop %v981
      %v983 = vmul.f32 %v976, 1.442695
      %v984 = vpow.pop %v983
      %v985 = vadd.f32 %v978, 1.0
      %v986 = vadd.f32 %v980, 1.0
      %v987 = vadd.f32 %v982, 1.0
      %v988 = vadd.f32 %v984, 1.0
      %v989 = vrcp.pop %v985
      %v990 = vmul.f32 1.0, %v989
      %v991 = vrcp.pop %v986
      %v992 = vmul.f32 1.0, %v991
      %v993 = vrcp.pop %v987
      %v994 = vmul.f32 1.0, %v993
      %v995 = vrcp.pop %v988
      %v996 = vmul.f32 1.0, %v995
      %1001 = vrot.lane.b32.xlu0 %v990, 32
      %v1002 = vpop.permute.xlu0 %1001
      %1003 = vrot.lane.b32.xlu0 %v992, 32
      %v1004 = vpop.permute.xlu0 %1003
      %1005 = vrot.lane.b32.xlu0 %v994, 32
      %v1006 = vpop.permute.xlu0 %1005
      %1007 = vrot.lane.b32.xlu0 %v996, 32
      %v1008 = vpop.permute.xlu0 %1007
      %v1013 = vmul.f32 %v969, %v1002
      %v1014 = vmul.f32 %v970, %v1004
      %v1015 = vmul.f32 %v971, %v1006
      %v1016 = vmul.f32 %v972, %v1008
      %v1017 = vsub.f32 1.0, %v990
      %v1018 = vsub.f32 1.0, %v992
      %v1019 = vsub.f32 1.0, %v994
      %v1020 = vsub.f32 1.0, %v996
      %1025 = vrot.lane.b32.xlu0 %v1017, 32
      %v1026 = vpop.permute.xlu0 %1025
      %1027 = vrot.lane.b32.xlu0 %v1018, 32
      %v1028 = vpop.permute.xlu0 %1027
      %1029 = vrot.lane.b32.xlu0 %v1019, 32
      %v1030 = vpop.permute.xlu0 %1029
      %1031 = vrot.lane.b32.xlu0 %v1020, 32
      %v1032 = vpop.permute.xlu0 %1031
      %v1037 = vmul.f32 %v319, %v1026
      %v1038 = vmul.f32 %v323, %v1028
      %v1039 = vmul.f32 %v326, %v1030
      %v1040 = vmul.f32 %v329, %v1032
      %v1041 = vadd.f32 %v1013, %v1037
      %v1042 = vadd.f32 %v1014, %v1038
      %v1043 = vadd.f32 %v1015, %v1039
      %v1044 = vadd.f32 %v1016, %v1040
      %1046 = vrot.lane.b32.xlu0 %v1042, 32
      %v1047 = vpop.permute.xlu0 %1046
      %1050 = vrot.lane.b32.xlu0 %v1043, 64
      %v1051 = vpop.permute.xlu0 %1050
      %1054 = vrot.lane.b32.xlu0 %v1044, 96
      %v1055 = vpop.permute.xlu0 %1054
      %v1057 = vsel %vm357, %v1041, %v1047
      %v1058 = vsel %vm638, %v1057, %v1051
      %v1059 = vsel %vm649, %v1058, %v1055
      %v1060 = vpack.c.bf16 %v1042, %v1041
      %v1061 = vpack.c.bf16 %v1044, %v1043
      %v1062 = vpack.c.bf16 %v1059, %v1059
      %s1063 = scalar_lea.vmem %s2, 16
      %v1064 = vld [vmem:[%s1063] sm:$0xf]
      %v1065 = vld [vmem:[%s1063 + $0x4] sm:$0xf]
      %v1066 = vld [vmem:[%s1063 + $0x8] sm:$0xf]
      %v1067 = vld [vmem:[%s1063 + $0xc] sm:$0xf]
      %s1068 = scalar_lea.vmem %s3, 1
      %v1069 = vld [vmem:[%s1068] sm:$0x1]
      %v1071 = vlaneseq
      %v1072 = vshrl.u32 %v1071, 7
      %v1073 = vsub.s32 0, %v1072
      %v1074 = vrot.slane %v1069, %v1073
      %v1080 = vunpack.c.l.b16 %v1064
      %v1081 = vunpack.c.l.b16 %v1065
      %v1082 = vunpack.c.l.b16 %v1066
      %v1083 = vunpack.c.l.b16 %v1067
      %v1084 = vpack.c.b16 %v1081, %v1080
      %v1085 = vpack.c.b16 %v1083, %v1082
      %v1089 = vsel %vm357, %v1060, 0
      %v1092 = vsel %vm357, %v1061, 0
      %1094 = vmatprep.subr.bf16.mxu0 0
      %1095 = vmatpush1.bf16.msra.mxu0 0
      %1096 = vmatprep.subr.bf16.mxu0 0
      %1097 = vmatpush1.bf16.msra.mxu0 0
      %1098 = vmatprep.subr.bf16.mxu0 0
      %1099 = vmatpush1.bf16.msra.mxu0 0
      %1100 = vmatprep.subr.bf16.mxu0 0
      %1101 = vmatpush1.bf16.msra.mxu0 0
      %1102 = vmatprep.subr.bf16.mxu0 0
      %1103 = vmatpush1.bf16.msra.mxu0 0
      %1104 = vmatprep.subr.bf16.mxu0 0
      %1105 = vmatpush1.bf16.msra.mxu0 0
      %1106 = vmatprep.subr.bf16.mxu0 0
      %1107 = vmatpush1.bf16.msra.mxu0 %v1085
      %1108 = vmatprep.subr.bf16.mxu0 0
      %1109 = vmatpush1.bf16.msra.mxu0 %v1084
      %1110 = vmatprep.subr.bf16.mxu0 0
      %1111 = vmatpush2.bf16.msra.mxu0 0
      %1112 = vmatprep.subr.bf16.mxu0 0
      %1113 = vmatpush2.bf16.msra.mxu0 0
      %1114 = vmatprep.subr.bf16.mxu0 0
      %1115 = vmatpush2.bf16.msra.mxu0 0
      %1116 = vmatprep.subr.bf16.mxu0 0
      %1117 = vmatpush2.bf16.msra.mxu0 0
      %1118 = vmatprep.subr.bf16.mxu0 0
      %1119 = vmatpush2.bf16.msra.mxu0 0
      %1120 = vmatprep.subr.bf16.mxu0 0
      %1121 = vmatpush2.bf16.msra.mxu0 0
      %1122 = vmatprep.subr.bf16.mxu0 0
      %1123 = vmatpush2.bf16.msra.mxu0 0
      %1124 = vmatprep.subr.bf16.mxu0 0
      %1125 = vmatpush2.bf16.msra.mxu0 0
      %1126 = vmatprep.mubr.bf16.mxu0 0
      %1127 = vmatmul.mubr.bf16.gmra.mxu0 %v1089
      %v1128 = vpop.f32.mrf.mxu0
      %v1129 = vadd.f32 %v1074, %v1128
      %v1130 = vpop.f32.mrf.mxu0
      %v1131 = vpop.f32.mrf.mxu0
      %v1132 = vadd.f32 %v1074, %v1131
      %v1133 = vpop.f32.mrf.mxu0
      %1134 = vmatprep.mubr.bf16.mxu0 0
      %1135 = vmatmul.mubr.bf16.gmra.mxu0 %v1092
      %v1136 = vpop.f32.mrf.mxu0
      %v1137 = vadd.f32 %v1074, %v1136
      %v1138 = vpop.f32.mrf.mxu0
      %v1139 = vpop.f32.mrf.mxu0
      %v1140 = vadd.f32 %v1074, %v1139
      %v1141 = vpop.f32.mrf.mxu0
      %1142 = vdwg.mxu0
      %s1143 = scalar_lea.vmem %s4, 64
      %v1144 = vld [vmem:[%s1143] sm:$0xf]
      %v1145 = vld [vmem:[%s1143 + $0x4] sm:$0xf]
      %v1146 = vld [vmem:[%s1143 + $0x8] sm:$0xf]
      %v1147 = vld [vmem:[%s1143 + $0xc] sm:$0xf]
      %v1148 = vld [vmem:[%s1143 + $0x10] sm:$0xf]
      %v1149 = vld [vmem:[%s1143 + $0x14] sm:$0xf]
      %v1150 = vld [vmem:[%s1143 + $0x18] sm:$0xf]
      %v1151 = vld [vmem:[%s1143 + $0x1c] sm:$0xf]
      %v1152 = vld [vmem:[%s1143 + $0x20] sm:$0xf]
      %v1153 = vld [vmem:[%s1143 + $0x24] sm:$0xf]
      %v1154 = vld [vmem:[%s1143 + $0x28] sm:$0xf]
      %v1155 = vld [vmem:[%s1143 + $0x2c] sm:$0xf]
      %v1156 = vld [vmem:[%s1143 + $0x30] sm:$0xf]
      %v1157 = vld [vmem:[%s1143 + $0x34] sm:$0xf]
      %v1158 = vld [vmem:[%s1143 + $0x38] sm:$0xf]
      %v1159 = vld [vmem:[%s1143 + $0x3c] sm:$0xf]
      %s1160 = scalar_lea.vmem %s5, 1
      %v1161 = vld [vmem:[%s1160] sm:$0x1]
      %v1163 = vlaneseq
      %v1164 = vshrl.u32 %v1163, 7
      %v1165 = vsub.s32 0, %v1164
      %v1166 = vrot.slane %v1161, %v1165
      %v1184 = vunpack.c.l.b16 %v1144
      %v1185 = vunpack.c.l.b16 %v1145
      %v1186 = vunpack.c.l.b16 %v1146
      %v1187 = vunpack.c.l.b16 %v1147
      %v1188 = vunpack.c.l.b16 %v1148
      %v1189 = vunpack.c.l.b16 %v1149
      %v1190 = vunpack.c.l.b16 %v1150
      %v1191 = vunpack.c.l.b16 %v1151
      %v1192 = vunpack.c.l.b16 %v1152
      %v1193 = vunpack.c.l.b16 %v1153
      %v1194 = vunpack.c.l.b16 %v1154
      %v1195 = vunpack.c.l.b16 %v1155
      %v1196 = vunpack.c.l.b16 %v1156
      %v1197 = vunpack.c.l.b16 %v1157
      %v1198 = vunpack.c.l.b16 %v1158
      %v1199 = vunpack.c.l.b16 %v1159
      %v1200 = vpack.c.b16 %v1185, %v1184
      %v1201 = vpack.c.b16 %v1187, %v1186
      %v1202 = vpack.c.b16 %v1189, %v1188
      %v1203 = vpack.c.b16 %v1191, %v1190
      %v1204 = vpack.c.b16 %v1193, %v1192
      %v1205 = vpack.c.b16 %v1195, %v1194
      %v1206 = vpack.c.b16 %v1197, %v1196
      %v1207 = vpack.c.b16 %v1199, %v1198
      %1216 = vmatprep.subr.bf16.mxu0 0
      %1217 = vmatpush1.bf16.msra.mxu0 %v1207
      %1218 = vmatprep.subr.bf16.mxu0 0
      %1219 = vmatpush1.bf16.msra.mxu0 %v1206
      %1220 = vmatprep.subr.bf16.mxu0 0
      %1221 = vmatpush1.bf16.msra.mxu0 %v1205
      %1222 = vmatprep.subr.bf16.mxu0 0
      %1223 = vmatpush1.bf16.msra.mxu0 %v1204
      %1224 = vmatprep.subr.bf16.mxu0 0
      %1225 = vmatpush1.bf16.msra.mxu0 %v1203
      %1226 = vmatprep.subr.bf16.mxu0 0
      %1227 = vmatpush1.bf16.msra.mxu0 %v1202
      %1228 = vmatprep.subr.bf16.mxu0 0
      %1229 = vmatpush1.bf16.msra.mxu0 %v1201
      %1230 = vmatprep.subr.bf16.mxu0 0
      %1231 = vmatpush1.bf16.msra.mxu0 %v1200
      %1232 = vmatprep.subr.bf16.mxu0 0
      %1233 = vmatpush2.bf16.msra.mxu0 0
      %1234 = vmatprep.subr.bf16.mxu0 0
      %1235 = vmatpush2.bf16.msra.mxu0 0
      %1236 = vmatprep.subr.bf16.mxu0 0
      %1237 = vmatpush2.bf16.msra.mxu0 0
      %1238 = vmatprep.subr.bf16.mxu0 0
      %1239 = vmatpush2.bf16.msra.mxu0 0
      %1240 = vmatprep.subr.bf16.mxu0 0
      %1241 = vmatpush2.bf16.msra.mxu0 0
      %1242 = vmatprep.subr.bf16.mxu0 0
      %1243 = vmatpush2.bf16.msra.mxu0 0
      %1244 = vmatprep.subr.bf16.mxu0 0
      %1245 = vmatpush2.bf16.msra.mxu0 0
      %1246 = vmatprep.subr.bf16.mxu0 0
      %1247 = vmatpush2.bf16.msra.mxu0 0
      %1248 = vmatprep.mubr.bf16.mxu0 0
      %1249 = vmatmul.mubr.bf16.gmra.mxu0 %v1062
      %v1250 = vpop.f32.mrf.mxu0
      %v1251 = vadd.f32 %v1166, %v1250
      %v1252 = vpop.f32.mrf.mxu0
      %v1253 = vpop.f32.mrf.mxu0
      %v1254 = vpop.f32.mrf.mxu0
      %1255 = vdwg.mxu0
      %s1256 = scalar_lea.vmem %s6, 16
      %v1257 = vld [vmem:[%s1256] sm:$0xf]
      %v1258 = vld [vmem:[%s1256 + $0x4] sm:$0xf]
      %v1259 = vld [vmem:[%s1256 + $0x8] sm:$0xf]
      %v1260 = vld [vmem:[%s1256 + $0xc] sm:$0xf]
      %s1261 = scalar_lea.vmem %s7, 1
      %v1262 = vld [vmem:[%s1261] sm:$0x1]
      %v1264 = vlaneseq
      %v1265 = vshrl.u32 %v1264, 7
      %v1266 = vsub.s32 0, %v1265
      %v1267 = vrot.slane %v1262, %v1266
      %v1273 = vunpack.c.l.b16 %v1257
      %v1274 = vunpack.c.l.b16 %v1258
      %v1275 = vunpack.c.l.b16 %v1259
      %v1276 = vunpack.c.l.b16 %v1260
      %v1277 = vpack.c.b16 %v1274, %v1273
      %v1278 = vpack.c.b16 %v1276, %v1275
      %1281 = vmatprep.subr.bf16.mxu0 0
      %1282 = vmatpush1.bf16.msra.mxu0 0
      %1283 = vmatprep.subr.bf16.mxu0 0
      %1284 = vmatpush1.bf16.msra.mxu0 0
      %1285 = vmatprep.subr.bf16.mxu0 0
      %1286 = vmatpush1.bf16.msra.mxu0 0
      %1287 = vmatprep.subr.bf16.mxu0 0
      %1288 = vmatpush1.bf16.msra.mxu0 0
      %1289 = vmatprep.subr.bf16.mxu0 0
      %1290 = vmatpush1.bf16.msra.mxu0 0
      %1291 = vmatprep.subr.bf16.mxu0 0
      %1292 = vmatpush1.bf16.msra.mxu0 0
      %1293 = vmatprep.subr.bf16.mxu0 0
      %1294 = vmatpush1.bf16.msra.mxu0 %v1278
      %1295 = vmatprep.subr.bf16.mxu0 0
      %1296 = vmatpush1.bf16.msra.mxu0 %v1277
      %1297 = vmatprep.subr.bf16.mxu0 0
      %1298 = vmatpush2.bf16.msra.mxu0 0
      %1299 = vmatprep.subr.bf16.mxu0 0
      %1300 = vmatpush2.bf16.msra.mxu0 0
      %1301 = vmatprep.subr.bf16.mxu0 0
      %1302 = vmatpush2.bf16.msra.mxu0 0
      %1303 = vmatprep.subr.bf16.mxu0 0
      %1304 = vmatpush2.bf16.msra.mxu0 0
      %1305 = vmatprep.subr.bf16.mxu0 0
      %1306 = vmatpush2.bf16.msra.mxu0 0
      %1307 = vmatprep.subr.bf16.mxu0 0
      %1308 = vmatpush2.bf16.msra.mxu0 0
      %1309 = vmatprep.subr.bf16.mxu0 0
      %1310 = vmatpush2.bf16.msra.mxu0 0
      %1311 = vmatprep.subr.bf16.mxu0 0
      %1312 = vmatpush2.bf16.msra.mxu0 0
      %1313 = vmatprep.mubr.bf16.mxu0 0
      %1314 = vmatmul.mubr.bf16.gmra.mxu0 %v1089
      %v1315 = vpop.f32.mrf.mxu0
      %v1316 = vadd.f32 %v1267, %v1315
      %v1317 = vpop.f32.mrf.mxu0
      %v1318 = vpop.f32.mrf.mxu0
      %v1319 = vadd.f32 %v1267, %v1318
      %v1320 = vpop.f32.mrf.mxu0
      %1321 = vmatprep.mubr.bf16.mxu0 0
      %1322 = vmatmul.mubr.bf16.gmra.mxu0 %v1092
      %v1323 = vpop.f32.mrf.mxu0
      %v1324 = vadd.f32 %v1267, %v1323
      %v1325 = vpop.f32.mrf.mxu0
      %v1326 = vpop.f32.mrf.mxu0
      %v1327 = vadd.f32 %v1267, %v1326
      %v1328 = vpop.f32.mrf.mxu0
      %1329 = vdwg.mxu0
      %1330 = vxpose.xlu0.b32.start [1/16] %v1316, 128
      %1331 = vxpose.xlu0.b32.cont [2/16] %v1319, 128
      %1332 = vxpose.xlu0.b32.cont [3/16] %v1324, 128
      %1333 = vxpose.xlu0.b32.cont [4/16] %v1327, 128
      %1334 = vxpose.xlu0.b32.cont [5/16] 0.0, 128
      %1335 = vxpose.xlu0.b32.cont [6/16] 0.0, 128
      %1336 = vxpose.xlu0.b32.cont [7/16] 0.0, 128
      %1337 = vxpose.xlu0.b32.cont [8/16] 0.0, 128
      %1338 = vxpose.xlu0.b32.cont [9/16] 0.0, 128
      %1339 = vxpose.xlu0.b32.cont [10/16] 0.0, 128
      %1340 = vxpose.xlu0.b32.cont [11/16] 0.0, 128
      %1341 = vxpose.xlu0.b32.cont [12/16] 0.0, 128
      %1342 = vxpose.xlu0.b32.cont [13/16] 0.0, 128
      %1343 = vxpose.xlu0.b32.cont [14/16] 0.0, 128
      %1344 = vxpose.xlu0.b32.cont [15/16] 0.0, 128
      %1345 = vxpose.xlu0.b32.end [16/16] 0.0, 128
      %v1346 = vpop.trf.xlu0
      %v1347 = vpop.trf.xlu0
      %v1348 = vpop.trf.xlu0
      %v1349 = vpop.trf.xlu0
      %v1350 = vpop.trf.xlu0
      %v1351 = vpop.trf.xlu0
      %v1352 = vpop.trf.xlu0
      %v1353 = vpop.trf.xlu0
      %v1354 = vpop.trf.xlu0
      %v1355 = vpop.trf.xlu0
      %v1356 = vpop.trf.xlu0
      %v1357 = vpop.trf.xlu0
      %v1358 = vpop.trf.xlu0
      %v1359 = vpop.trf.xlu0
      %v1360 = vpop.trf.xlu0
      %v1361 = vpop.trf.xlu0
      %v1363 = vrot.slane %v1346, 1
      %1364 = vrot.lane.b32.xlu0 %v1363, 32
      %v1365 = vpop.permute.xlu0 %1364
      %v1367 = vrot.slane %v1346, 2
      %1368 = vrot.lane.b32.xlu0 %v1367, 64
      %v1369 = vpop.permute.xlu0 %1368
      %v1371 = vsel %vm357, %v1346, %v1365
      %v1372 = vsel %vm638, %v1371, %v1369
      %v1373 = vlaneseq
      %v1374 = vshrl.u32 %v1373, 7
      %v1375 = vsub.s32 0, %v1374
      %v1376 = vrot.slane %v1372, %v1375
      %v1377 = vadd.f32 %v1376, %v1251
      %vm1378 = vcmp.gt.f32.partialorder %v1377, 0.0
      %v1379 = vmul.f32 %v1377, 0.2
      %v1380 = vsel %vm1378, %v1377, %v1379
      %v1381 = vadd.f32 %v1380, %v320
      %v1382 = vsel %vm649, %v1381, -inf
      %v1383 = vrot.slane %v1382, 4
      %v1384 = vmax.f32 %v1382, %v1383
      %v1385 = vrot.slane %v1384, 2
      %v1386 = vmax.f32 %v1384, %v1385
      %v1387 = vrot.slane %v1386, 1
      %v1388 = vmax.f32 %v1386, %v1387
      %v1389 = vsub.f32 %v1381, %v1388
      %v1390 = vmul.f32 %v1389, 1.442695
      %v1391 = vpow.pop %v1390
      %v1392 = vsel %vm649, %v1391, 0.0
      %v1393 = vrot.slane %v1392, 4
      %v1394 = vadd.f32 %v1392, %v1393
      %v1395 = vrot.slane %v1394, 2
      %v1396 = vadd.f32 %v1394, %v1395
      %v1397 = vrot.slane %v1396, 1
      %v1398 = vadd.f32 %v1396, %v1397
      %v1399 = vrcp.pop %v1398
      %v1400 = vmul.f32 %v1391, %v1399
      %1401 = vxpose.xlu0.b32.start [1/16] %v1400, 128
      %1402 = vxpose.xlu0.b32.cont [2/16] 0.0, 128
      %1403 = vxpose.xlu0.b32.cont [3/16] 0.0, 128
      %1404 = vxpose.xlu0.b32.cont [4/16] 0.0, 128
      %1405 = vxpose.xlu0.b32.cont [5/16] 0.0, 128
      %1406 = vxpose.xlu0.b32.cont [6/16] 0.0, 128
      %1407 = vxpose.xlu0.b32.cont [7/16] 0.0, 128
      %1408 = vxpose.xlu0.b32.cont [8/16] 0.0, 128
      %1409 = vxpose.xlu0.b32.cont [9/16] 0.0, 128
      %1410 = vxpose.xlu0.b32.cont [10/16] 0.0, 128
      %1411 = vxpose.xlu0.b32.cont [11/16] 0.0, 128
      %1412 = vxpose.xlu0.b32.cont [12/16] 0.0, 128
      %1413 = vxpose.xlu0.b32.cont [13/16] 0.0, 128
      %1414 = vxpose.xlu0.b32.cont [14/16] 0.0, 128
      %1415 = vxpose.xlu0.b32.cont [15/16] 0.0, 128
      %1416 = vxpose.xlu0.b32.end [16/16] 0.0, 128
      %v1417 = vpop.trf.xlu0
      %v1418 = vpop.trf.xlu0
      %v1419 = vpop.trf.xlu0
      %v1420 = vpop.trf.xlu0
      %v1421 = vpop.trf.xlu0
      %v1422 = vpop.trf.xlu0
      %v1423 = vpop.trf.xlu0
      %v1424 = vpop.trf.xlu0
      %v1425 = vpop.trf.xlu0
      %v1426 = vpop.trf.xlu0
      %v1427 = vpop.trf.xlu0
      %v1428 = vpop.trf.xlu0
      %v1429 = vpop.trf.xlu0
      %v1430 = vpop.trf.xlu0
      %v1431 = vpop.trf.xlu0
      %v1432 = vpop.trf.xlu0
      %1434 = vrot.lane.b32.xlu0 %v1421, 8
      %v1435 = vpop.permute.xlu0 %1434
      %1438 = vrot.lane.b32.xlu0 %v1425, 16
      %v1439 = vpop.permute.xlu0 %1438
      %v1441 = vsel %vm709, %v1417, %v1435
      %v1442 = vsel %vm711, %v1441, %v1439
      %1444 = vrot.lane.b32.xlu0 %v1129, 96
      %v1445 = vpop.permute.xlu0 %1444
      %1447 = vrot.lane.b32.xlu0 %v1129, 64
      %v1448 = vpop.permute.xlu0 %1447
      %v1450 = vpack.c.bf16 %v1442, %v1442
      %v1451 = vpack.c.bf16 %v1445, %v1129
      %v1452 = vpack.c.bf16 %v1448, %v1448
      %v1454 = vsel %vm723, %v1450, 0
      %v1457 = vsel %vm727, %v1452, 0
      %1459 = vmatprep.subr.bf16.mxu0 0
      %1460 = vmatpush1.bf16.msra.mxu0 0
      %1461 = vmatprep.subr.bf16.mxu0 0
      %1462 = vmatpush1.bf16.msra.mxu0 0
      %1463 = vmatprep.subr.bf16.mxu0 0
      %1464 = vmatpush1.bf16.msra.mxu0 0
      %1465 = vmatprep.subr.bf16.mxu0 0
      %1466 = vmatpush1.bf16.msra.mxu0 0
      %1467 = vmatprep.subr.bf16.mxu0 0
      %1468 = vmatpush1.bf16.msra.mxu0 0
      %1469 = vmatprep.subr.bf16.mxu0 0
      %1470 = vmatpush1.bf16.msra.mxu0 0
      %1471 = vmatprep.subr.bf16.mxu0 0
      %1472 = vmatpush1.bf16.msra.mxu0 %v1457
      %1473 = vmatprep.subr.bf16.mxu0 0
      %1474 = vmatpush1.bf16.msra.mxu0 %v1451
      %1475 = vmatprep.subr.bf16.mxu0 0
      %1476 = vmatpush2.bf16.msra.mxu0 0
      %1477 = vmatprep.subr.bf16.mxu0 0
      %1478 = vmatpush2.bf16.msra.mxu0 0
      %1479 = vmatprep.subr.bf16.mxu0 0
      %1480 = vmatpush2.bf16.msra.mxu0 0
      %1481 = vmatprep.subr.bf16.mxu0 0
      %1482 = vmatpush2.bf16.msra.mxu0 0
      %1483 = vmatprep.subr.bf16.mxu0 0
      %1484 = vmatpush2.bf16.msra.mxu0 0
      %1485 = vmatprep.subr.bf16.mxu0 0
      %1486 = vmatpush2.bf16.msra.mxu0 0
      %1487 = vmatprep.subr.bf16.mxu0 0
      %1488 = vmatpush2.bf16.msra.mxu0 0
      %1489 = vmatprep.subr.bf16.mxu0 0
      %1490 = vmatpush2.bf16.msra.mxu0 0
      %1491 = vmatprep.mubr.bf16.mxu0 0
      %1492 = vmatmul.mubr.bf16.gmra.mxu0 %v1454
      %v1493 = vpop.f32.mrf.mxu0
      %v1494 = vadd.f32 0.0, %v1493
      %v1495 = vpop.f32.mrf.mxu0
      %v1496 = vpop.f32.mrf.mxu0
      %v1497 = vpop.f32.mrf.mxu0
      %1498 = vdwg.mxu0
      %1500 = vrot.lane.b32.xlu0 %v1422, 8
      %v1501 = vpop.permute.xlu0 %1500
      %1504 = vrot.lane.b32.xlu0 %v1426, 16
      %v1505 = vpop.permute.xlu0 %1504
      %v1507 = vsel %vm709, %v1418, %v1501
      %v1508 = vsel %vm711, %v1507, %v1505
      %1510 = vrot.lane.b32.xlu0 %v1132, 96
      %v1511 = vpop.permute.xlu0 %1510
      %1513 = vrot.lane.b32.xlu0 %v1132, 64
      %v1514 = vpop.permute.xlu0 %1513
      %v1516 = vpack.c.bf16 %v1508, %v1508
      %v1517 = vpack.c.bf16 %v1511, %v1132
      %v1518 = vpack.c.bf16 %v1514, %v1514
      %v1520 = vsel %vm723, %v1516, 0
      %v1523 = vsel %vm727, %v1518, 0
      %1525 = vmatprep.subr.bf16.mxu0 0
      %1526 = vmatpush1.bf16.msra.mxu0 0
      %1527 = vmatprep.subr.bf16.mxu0 0
      %1528 = vmatpush1.bf16.msra.mxu0 0
      %1529 = vmatprep.subr.bf16.mxu0 0
      %1530 = vmatpush1.bf16.msra.mxu0 0
      %1531 = vmatprep.subr.bf16.mxu0 0
      %1532 = vmatpush1.bf16.msra.mxu0 0
      %1533 = vmatprep.subr.bf16.mxu0 0
      %1534 = vmatpush1.bf16.msra.mxu0 0
      %1535 = vmatprep.subr.bf16.mxu0 0
      %1536 = vmatpush1.bf16.msra.mxu0 0
      %1537 = vmatprep.subr.bf16.mxu0 0
      %1538 = vmatpush1.bf16.msra.mxu0 %v1523
      %1539 = vmatprep.subr.bf16.mxu0 0
      %1540 = vmatpush1.bf16.msra.mxu0 %v1517
      %1541 = vmatprep.subr.bf16.mxu0 0
      %1542 = vmatpush2.bf16.msra.mxu0 0
      %1543 = vmatprep.subr.bf16.mxu0 0
      %1544 = vmatpush2.bf16.msra.mxu0 0
      %1545 = vmatprep.subr.bf16.mxu0 0
      %1546 = vmatpush2.bf16.msra.mxu0 0
      %1547 = vmatprep.subr.bf16.mxu0 0
      %1548 = vmatpush2.bf16.msra.mxu0 0
      %1549 = vmatprep.subr.bf16.mxu0 0
      %1550 = vmatpush2.bf16.msra.mxu0 0
      %1551 = vmatprep.subr.bf16.mxu0 0
      %1552 = vmatpush2.bf16.msra.mxu0 0
      %1553 = vmatprep.subr.bf16.mxu0 0
      %1554 = vmatpush2.bf16.msra.mxu0 0
      %1555 = vmatprep.subr.bf16.mxu0 0
      %1556 = vmatpush2.bf16.msra.mxu0 0
      %1557 = vmatprep.mubr.bf16.mxu0 0
      %1558 = vmatmul.mubr.bf16.gmra.mxu0 %v1520
      %v1559 = vpop.f32.mrf.mxu0
      %v1560 = vadd.f32 0.0, %v1559
      %v1561 = vpop.f32.mrf.mxu0
      %v1562 = vpop.f32.mrf.mxu0
      %v1563 = vpop.f32.mrf.mxu0
      %1564 = vdwg.mxu0
      %1566 = vrot.lane.b32.xlu0 %v1423, 8
      %v1567 = vpop.permute.xlu0 %1566
      %1570 = vrot.lane.b32.xlu0 %v1427, 16
      %v1571 = vpop.permute.xlu0 %1570
      %v1573 = vsel %vm709, %v1419, %v1567
      %v1574 = vsel %vm711, %v1573, %v1571
      %1576 = vrot.lane.b32.xlu0 %v1137, 96
      %v1577 = vpop.permute.xlu0 %1576
      %1579 = vrot.lane.b32.xlu0 %v1137, 64
      %v1580 = vpop.permute.xlu0 %1579
      %v1582 = vpack.c.bf16 %v1574, %v1574
      %v1583 = vpack.c.bf16 %v1577, %v1137
      %v1584 = vpack.c.bf16 %v1580, %v1580
      %v1586 = vsel %vm723, %v1582, 0
      %v1589 = vsel %vm727, %v1584, 0
      %1591 = vmatprep.subr.bf16.mxu0 0
      %1592 = vmatpush1.bf16.msra.mxu0 0
      %1593 = vmatprep.subr.bf16.mxu0 0
      %1594 = vmatpush1.bf16.msra.mxu0 0
      %1595 = vmatprep.subr.bf16.mxu0 0
      %1596 = vmatpush1.bf16.msra.mxu0 0
      %1597 = vmatprep.subr.bf16.mxu0 0
      %1598 = vmatpush1.bf16.msra.mxu0 0
      %1599 = vmatprep.subr.bf16.mxu0 0
      %1600 = vmatpush1.bf16.msra.mxu0 0
      %1601 = vmatprep.subr.bf16.mxu0 0
      %1602 = vmatpush1.bf16.msra.mxu0 0
      %1603 = vmatprep.subr.bf16.mxu0 0
      %1604 = vmatpush1.bf16.msra.mxu0 %v1589
      %1605 = vmatprep.subr.bf16.mxu0 0
      %1606 = vmatpush1.bf16.msra.mxu0 %v1583
      %1607 = vmatprep.subr.bf16.mxu0 0
      %1608 = vmatpush2.bf16.msra.mxu0 0
      %1609 = vmatprep.subr.bf16.mxu0 0
      %1610 = vmatpush2.bf16.msra.mxu0 0
      %1611 = vmatprep.subr.bf16.mxu0 0
      %1612 = vmatpush2.bf16.msra.mxu0 0
      %1613 = vmatprep.subr.bf16.mxu0 0
      %1614 = vmatpush2.bf16.msra.mxu0 0
      %1615 = vmatprep.subr.bf16.mxu0 0
      %1616 = vmatpush2.bf16.msra.mxu0 0
      %1617 = vmatprep.subr.bf16.mxu0 0
      %1618 = vmatpush2.bf16.msra.mxu0 0
      %1619 = vmatprep.subr.bf16.mxu0 0
      %1620 = vmatpush2.bf16.msra.mxu0 0
      %1621 = vmatprep.subr.bf16.mxu0 0
      %1622 = vmatpush2.bf16.msra.mxu0 0
      %1623 = vmatprep.mubr.bf16.mxu0 0
      %1624 = vmatmul.mubr.bf16.gmra.mxu0 %v1586
      %v1625 = vpop.f32.mrf.mxu0
      %v1626 = vadd.f32 0.0, %v1625
      %v1627 = vpop.f32.mrf.mxu0
      %v1628 = vpop.f32.mrf.mxu0
      %v1629 = vpop.f32.mrf.mxu0
      %1630 = vdwg.mxu0
      %1632 = vrot.lane.b32.xlu0 %v1424, 8
      %v1633 = vpop.permute.xlu0 %1632
      %1636 = vrot.lane.b32.xlu0 %v1428, 16
      %v1637 = vpop.permute.xlu0 %1636
      %v1639 = vsel %vm709, %v1420, %v1633
      %v1640 = vsel %vm711, %v1639, %v1637
      %1642 = vrot.lane.b32.xlu0 %v1140, 96
      %v1643 = vpop.permute.xlu0 %1642
      %1645 = vrot.lane.b32.xlu0 %v1140, 64
      %v1646 = vpop.permute.xlu0 %1645
      %v1648 = vpack.c.bf16 %v1640, %v1640
      %v1649 = vpack.c.bf16 %v1643, %v1140
      %v1650 = vpack.c.bf16 %v1646, %v1646
      %v1652 = vsel %vm723, %v1648, 0
      %v1655 = vsel %vm727, %v1650, 0
      %1657 = vmatprep.subr.bf16.mxu0 0
      %1658 = vmatpush1.bf16.msra.mxu0 0
      %1659 = vmatprep.subr.bf16.mxu0 0
      %1660 = vmatpush1.bf16.msra.mxu0 0
      %1661 = vmatprep.subr.bf16.mxu0 0
      %1662 = vmatpush1.bf16.msra.mxu0 0
      %1663 = vmatprep.subr.bf16.mxu0 0
      %1664 = vmatpush1.bf16.msra.mxu0 0
      %1665 = vmatprep.subr.bf16.mxu0 0
      %1666 = vmatpush1.bf16.msra.mxu0 0
      %1667 = vmatprep.subr.bf16.mxu0 0
      %1668 = vmatpush1.bf16.msra.mxu0 0
      %1669 = vmatprep.subr.bf16.mxu0 0
      %1670 = vmatpush1.bf16.msra.mxu0 %v1655
      %1671 = vmatprep.subr.bf16.mxu0 0
      %1672 = vmatpush1.bf16.msra.mxu0 %v1649
      %1673 = vmatprep.subr.bf16.mxu0 0
      %1674 = vmatpush2.bf16.msra.mxu0 0
      %1675 = vmatprep.subr.bf16.mxu0 0
      %1676 = vmatpush2.bf16.msra.mxu0 0
      %1677 = vmatprep.subr.bf16.mxu0 0
      %1678 = vmatpush2.bf16.msra.mxu0 0
      %1679 = vmatprep.subr.bf16.mxu0 0
      %1680 = vmatpush2.bf16.msra.mxu0 0
      %1681 = vmatprep.subr.bf16.mxu0 0
      %1682 = vmatpush2.bf16.msra.mxu0 0
      %1683 = vmatprep.subr.bf16.mxu0 0
      %1684 = vmatpush2.bf16.msra.mxu0 0
      %1685 = vmatprep.subr.bf16.mxu0 0
      %1686 = vmatpush2.bf16.msra.mxu0 0
      %1687 = vmatprep.subr.bf16.mxu0 0
      %1688 = vmatpush2.bf16.msra.mxu0 0
      %1689 = vmatprep.mubr.bf16.mxu0 0
      %1690 = vmatmul.mubr.bf16.gmra.mxu0 %v1652
      %v1691 = vpop.f32.mrf.mxu0
      %v1692 = vadd.f32 0.0, %v1691
      %v1693 = vpop.f32.mrf.mxu0
      %v1694 = vpop.f32.mrf.mxu0
      %v1695 = vpop.f32.mrf.mxu0
      %1696 = vdwg.mxu0
      %v1697 = vmax.f32 %v1494, 0.0
      %v1698 = vmax.f32 %v1560, 0.0
      %v1699 = vmax.f32 %v1626, 0.0
      %v1700 = vmax.f32 %v1692, 0.0
      %v1701 = vxor.u32 %v1129, 2147483648
      %v1702 = vxor.u32 %v1132, 2147483648
      %v1703 = vxor.u32 %v1137, 2147483648
      %v1704 = vxor.u32 %v1140, 2147483648
      %v1705 = vmul.f32 %v1701, 1.442695
      %v1706 = vpow.pop %v1705
      %v1707 = vmul.f32 %v1702, 1.442695
      %v1708 = vpow.pop %v1707
      %v1709 = vmul.f32 %v1703, 1.442695
      %v1710 = vpow.pop %v1709
      %v1711 = vmul.f32 %v1704, 1.442695
      %v1712 = vpow.pop %v1711
      %v1713 = vadd.f32 %v1706, 1.0
      %v1714 = vadd.f32 %v1708, 1.0
      %v1715 = vadd.f32 %v1710, 1.0
      %v1716 = vadd.f32 %v1712, 1.0
      %v1717 = vrcp.pop %v1713
      %v1718 = vmul.f32 1.0, %v1717
      %v1719 = vrcp.pop %v1714
      %v1720 = vmul.f32 1.0, %v1719
      %v1721 = vrcp.pop %v1715
      %v1722 = vmul.f32 1.0, %v1721
      %v1723 = vrcp.pop %v1716
      %v1724 = vmul.f32 1.0, %v1723
      %1729 = vrot.lane.b32.xlu0 %v1718, 32
      %v1730 = vpop.permute.xlu0 %1729
      %1731 = vrot.lane.b32.xlu0 %v1720, 32
      %v1732 = vpop.permute.xlu0 %1731
      %1733 = vrot.lane.b32.xlu0 %v1722, 32
      %v1734 = vpop.permute.xlu0 %1733
      %1735 = vrot.lane.b32.xlu0 %v1724, 32
      %v1736 = vpop.permute.xlu0 %1735
      %v1741 = vmul.f32 %v1697, %v1730
      %v1742 = vmul.f32 %v1698, %v1732
      %v1743 = vmul.f32 %v1699, %v1734
      %v1744 = vmul.f32 %v1700, %v1736
      %v1745 = vsub.f32 1.0, %v1718
      %v1746 = vsub.f32 1.0, %v1720
      %v1747 = vsub.f32 1.0, %v1722
      %v1748 = vsub.f32 1.0, %v1724
      %1753 = vrot.lane.b32.xlu0 %v1745, 32
      %v1754 = vpop.permute.xlu0 %1753
      %1755 = vrot.lane.b32.xlu0 %v1746, 32
      %v1756 = vpop.permute.xlu0 %1755
      %1757 = vrot.lane.b32.xlu0 %v1747, 32
      %v1758 = vpop.permute.xlu0 %1757
      %1759 = vrot.lane.b32.xlu0 %v1748, 32
      %v1760 = vpop.permute.xlu0 %1759
      %v1765 = vmul.f32 %v1041, %v1754
      %v1766 = vmul.f32 %v1042, %v1756
      %v1767 = vmul.f32 %v1043, %v1758
      %v1768 = vmul.f32 %v1044, %v1760
      %v1769 = vadd.f32 %v1741, %v1765
      %v1770 = vadd.f32 %v1742, %v1766
      %v1771 = vadd.f32 %v1743, %v1767
      %v1772 = vadd.f32 %v1744, %v1768
      %1774 = vrot.lane.b32.xlu0 %v1770, 32
      %v1775 = vpop.permute.xlu0 %1774
      %1778 = vrot.lane.b32.xlu0 %v1771, 64
      %v1779 = vpop.permute.xlu0 %1778
      %1782 = vrot.lane.b32.xlu0 %v1772, 96
      %v1783 = vpop.permute.xlu0 %1782
      %v1785 = vsel %vm357, %v1769, %v1775
      %v1786 = vsel %vm638, %v1785, %v1779
      %v1787 = vsel %vm649, %v1786, %v1783
      %1788 = vst [vmem:[%s317] sm:$0xff] %v1787
      %p1789 = scmp.lt.s32.totalorder %s19, 1
      %s1790 = scalar_select %p1789, %s19, 1
      %s1791 = smul.addr %s1790, 8
      %s1792 = scalar_lea.vmem %s8, %s1791
      // Predicated region
      $region53: #{gat_forward.1} parent=51 // pred_check
        %p1793 = pneg %p215
      $region54: #{gat_forward.1} parent=51 // pred_check_branch
        %1795 = sbr.rel (%p1793) target = $region56
      $region55: #{gat_forward.1} parent=51 // pred_region
        _
      $region56: #{gat_forward.1} parent=51 // pred_fallthru
        _
    $region52: #{gat_forward.1} parent=5 // pred_fallthru
      _
    %p1796 = scmp.le.s32.totalorder 2, %s14
    // Predicated region
    $region57: #{gat_forward.1} parent=5 // pred_check
      %p1797 = pneg %p1796
    $region58: #{gat_forward.1} parent=5 // pred_check_branch
      %1799 = sbr.rel (%p1797) target = $region60
    $region59: #{gat_forward.1} parent=5 // pred_region
      %s1800 = ssub.s32 %s14, 2
      // Predicated region
      $region61: #{gat_forward.1} parent=59 // pred_check
        %p1801 = pneg %p221
      $region62: #{gat_forward.1} parent=59 // pred_check_branch
        %1803 = sbr.rel (%p1801) target = $region64
      $region63: #{gat_forward.1} parent=59 // pred_region
        %p1804 = scmp.lt.s32.totalorder %s20, 1
        %s1805 = scalar_select %p1804, %s20, 1
        %s1806 = smul.addr %s1805, 8
        %s1807 = scalar_lea.vmem %s8, %s1806
      $region64: #{gat_forward.1} parent=59 // pred_fallthru
        _
    $region60: #{gat_forward.1} parent=5 // pred_fallthru
      _
  $region6: #{gat_forward.1} parent=0 // loop_footer
    %s18 = sadd.s32 1, %s14
  $region7: #{gat_forward.1} parent=0 // loop_footer_branch
    %13 = sbr.rel target = $region3
  $region8: #{gat_forward.1} parent=0 // loop_exit
    _

</llo_original>
